<compile_context>
chip_gen: v6e
topology: v6e:2x2x1
jax: 0.10.0
libtpu: 0.0.40
codegen_flags: <defaults>
</compile_context>

<pallas_src>
import jax
import jax.numpy as jnp
from jax.experimental import pallas as pl
from jax.experimental.pallas import tpu as pltpu


def _round_up(x: int, m: int) -> int:
    return ((x + m - 1) // m) * m


# ----------------------------------------------------------------------------
# Pallas kernel: fused 3-layer MLP (split-K encoder replaces the concat)
# ----------------------------------------------------------------------------
def protocomnet_kernel(f_ref, c_ref, w1a_ref, w1b_ref, b1_ref,
                       w2_ref, b2_ref, w3_ref, b3_ref, o_ref):
    # Operands arrive in their compute dtype (bf16 by default) and feed the MXU
    # directly; accumulation is f32. Bias-add / ReLU epilogues stay in f32 (v5e
    # has no bf16 VPU path). Intermediates are cast to the *next* weight's dtype,
    # so an all-f32 parameter set yields an exact f32 path through this kernel.

    # encoder: Linear(in_dim + clip_dim -> hid) + ReLU, concat expressed as split-K
    z = (jnp.dot(f_ref[...], w1a_ref[...], preferred_element_type=jnp.float32)
         + jnp.dot(c_ref[...], w1b_ref[...], preferred_element_type=jnp.float32)
         + b1_ref[...])
    z = jnp.maximum(z, 0.0).astype(w2_ref.dtype)

    # decoder[0]: Linear(hid -> 512) + ReLU
    h = jnp.dot(z, w2_ref[...], preferred_element_type=jnp.float32) + b2_ref[...]
    h = jnp.maximum(h, 0.0).astype(w3_ref.dtype)

    # decoder[2]: Linear(512 -> out_dim), no activation
    out = jnp.dot(h, w3_ref[...], preferred_element_type=jnp.float32) + b3_ref[...]
    o_ref[...] = out.astype(o_ref.dtype)


# ----------------------------------------------------------------------------
# Wrapper: batch-tiled pallas_call with weight-resident BlockSpecs
# ----------------------------------------------------------------------------
def protocomnet_forward(feats, clip_embs, params, *, tm=512, out_dtype=jnp.bfloat16):
    """feats: (N, in_dim); clip_embs: (N, clip_dim).
    params = (w1a, w1b, b1, w2, b2, w3, b3) with weights (in, out) in the compute
    dtype (bf16 by default) and biases (1, out) in f32.

    For best performance the producer should already emit bf16 activations; if not,
    they are cast here (the cast then fuses upstream under jit)."""
    w1a, w1b, b1, w2, b2, w3, b3 = params
    n, in_dim = feats.shape
    clip_dim = clip_embs.shape[1]
    hid = w1a.shape[1]
    mid = w2.shape[1]
    out_dim = w3.shape[1]

    # Match activation dtype to the weights' compute dtype (bf16 -> half-width DMA).
    cdt = w1a.dtype
    if feats.dtype != cdt:
        feats = feats.astype(cdt)
    if clip_embs.dtype != cdt:
        clip_embs = clip_embs.astype(cdt)

    # Batch tile: bf16 MXU operands pack 16 sublanes per vreg -> round to 16.
    n_pad = _round_up(max(n, 1), 16)
    tm = max(16, min(tm, n_pad))
    # v7x has 2 TensorCores: give the (parallel) batch grid >= 2 steps when the
    # batch is big enough so both cores get work. No-op on 1-TC v5e/v6e.
    if pl.cdiv(n, tm) < 2 and n_pad >= 32:
        tm = _round_up(pl.cdiv(n, 2), 16)
    grid = (pl.cdiv(n, tm),)

    act_spec = lambda d: pl.BlockSpec((tm, d), lambda i: (i, 0))   # tiled over batch
    res_spec = lambda s: pl.BlockSpec(s, lambda i: (0, 0))         # VMEM-resident

    weight_bytes = sum(int(p.size) * p.dtype.itemsize for p in params)
    out_itemsize = jnp.dtype(out_dtype).itemsize
    cost = pl.CostEstimate(
        flops=2 * n * (in_dim * hid + clip_dim * hid + hid * mid + mid * out_dim),
        transcendentals=0,
        bytes_accessed=(weight_bytes
                        + n * in_dim * feats.dtype.itemsize
                        + n * clip_dim * clip_embs.dtype.itemsize
                        + n * out_dim * out_itemsize),
    )

    return pl.pallas_call(
        protocomnet_kernel,
        out_shape=jax.ShapeDtypeStruct((n, out_dim), out_dtype),
        grid_spec=pltpu.PrefetchScalarGridSpec(
            num_scalar_prefetch=0,
            grid=grid,
            in_specs=[
                act_spec(in_dim),            # feats tile (bf16)
                act_spec(clip_dim),          # clip_embs tile (bf16)
                res_spec((in_dim, hid)),     # W1a
                res_spec((clip_dim, hid)),   # W1b
                res_spec((1, hid)),          # b1
                res_spec((hid, mid)),        # W2
                res_spec((1, mid)),          # b2
                res_spec((mid, out_dim)),    # W3
                res_spec((1, out_dim)),      # b3
            ],
            out_specs=act_spec(out_dim),
        ),
        compiler_params=pltpu.CompilerParams(
            dimension_semantics=("parallel",),   # shards batch tiles across TCs on v7x
        ),
        cost_estimate=cost,
    )(feats, clip_embs, w1a, w1b, b1, w2, b2, w3, b3)


# ----------------------------------------------------------------------------
# Deterministic parameter init (mimics nn.Linear's U(-1/sqrt(fan_in), +...))
# ----------------------------------------------------------------------------
def init_linear(key, fan_in, fan_out):
    kw, kb = jax.random.split(key)
    bound = 1.0 / jnp.sqrt(fan_in)
    # stored as (in, out) -> equivalent to PyTorch weight (out, in) transposed
    w = jax.random.uniform(kw, (fan_in, fan_out), jnp.float32, -bound, bound)
    b = jax.random.uniform(kb, (1, fan_out), jnp.float32, -bound, bound)
    return w, b


def init_protocomnet_params(key, in_dim=512, clip_semantic_dim=512, out_dim=512,
                            param_dtype=jnp.bfloat16):
    hid = (in_dim + clip_semantic_dim) // 4          # encoder hidden = 256
    k1, k2, k3 = jax.random.split(key, 3)
    w1, b1 = init_linear(k1, in_dim + clip_semantic_dim, hid)   # encoder Linear
    w2, b2 = init_linear(k2, hid, 512)                          # decoder Linear 1
    w3, b3 = init_linear(k3, 512, out_dim)                      # decoder Linear 2
    # Split W1 along its input dim (replaces the activation concat). Weights go to
    # the compute dtype (bf16 default; pass jnp.float32 for an exact-f32 fallback);
    # biases stay f32 (epilogue stays f32).
    w1a = w1[:in_dim].astype(param_dtype)
    w1b = w1[in_dim:].astype(param_dtype)
    return (w1a, w1b, b1,
            w2.astype(param_dtype), b2,
            w3.astype(param_dtype), b3)


# ----------------------------------------------------------------------------
# Pure-JAX references for correctness checks
# ----------------------------------------------------------------------------
def protocomnet_ref_matched(feats, clip_embs, params):
    """Same numerics as the kernel (compute-dtype matmul inputs, f32 accumulation,
    f32 epilogues); final result left in f32."""
    w1a, w1b, b1, w2, b2, w3, b3 = params
    f = feats.astype(w1a.dtype)
    c = clip_embs.astype(w1b.dtype)
    z = (jnp.dot(f, w1a, preferred_element_type=jnp.float32)
         + jnp.dot(c, w1b, preferred_element_type=jnp.float32) + b1)
    z = jnp.maximum(z, 0.0).astype(w2.dtype)
    h = jnp.dot(z, w2, preferred_element_type=jnp.float32) + b2
    h = jnp.maximum(h, 0.0).astype(w3.dtype)
    return jnp.dot(h, w3, preferred_element_type=jnp.float32) + b3


def protocomnet_ref_f32(feats, clip_embs, params):
    """Full-f32 reference of the original module semantics (concat form)."""
    w1a, w1b, b1, w2, b2, w3, b3 = params
    w1 = jnp.concatenate([w1a.astype(jnp.float32), w1b.astype(jnp.float32)], axis=0)
    x = jnp.concatenate([feats.astype(jnp.float32),
                         clip_embs.astype(jnp.float32)], axis=1)
    z = jnp.maximum(x @ w1 + b1, 0.0)
    h = jnp.maximum(z @ w2.astype(jnp.float32) + b2, 0.0)
    return h @ w3.astype(jnp.float32) + b3


if __name__ == "__main__":
    # Small, deterministic example consistent with module defaults:
    # N=8 "support prototypes", 512-d visual feats, 512-d CLIP semantic embeddings.
    in_dim, clip_dim, out_dim = 512, 512, 512
    n = 8

    key = jax.random.PRNGKey(0)
    k_feat, k_clip, k_param = jax.random.split(key, 3)

    feats_f32 = jax.random.normal(k_feat, (n, in_dim), jnp.float32)
    clip_f32 = jax.random.normal(k_clip, (n, clip_dim), jnp.float32)
    params = init_protocomnet_params(k_param, in_dim, clip_dim, out_dim)

    # Producer-side bf16 activations (backbone features / CLIP embeddings are usually
    # already bf16) -> the kernel's HBM input streams are half-width.
    feats = feats_f32.astype(jnp.bfloat16)
    clip_embs = clip_f32.astype(jnp.bfloat16)

    # TODO(synk): 'train_ComNet' mode (pickle-loaded class stats, reparameterize +
    # MSE loss) and the wnid -> clip-embedding dict lookup are host-side; only the
    # tensor compute of the 'boost_supports' path is implemented here.

    out = protocomnet_forward(feats, clip_embs, params)
    out = jax.block_until_ready(out)
    assert out.shape == (n, out_dim)
    out_f32 = out.astype(jnp.float32)

    # Tight check vs. a reference with matching numerics (bf16 in, f32 accum).
    ref_matched = protocomnet_ref_matched(feats, clip_embs, params)
    assert jnp.allclose(out_f32, ref_matched, atol=1e-2, rtol=1e-2), "mismatch vs matched ref"

    # Loose check vs. the original full-f32 semantics (bf16 rounding of weights,
    # inputs and output only).
    ref_f32 = protocomnet_ref_f32(feats_f32, clip_f32, params)
    assert jnp.allclose(out_f32, ref_f32, atol=5e-2, rtol=5e-2), "mismatch vs f32 ref"

    print("KERNEL_OK")
</pallas_src>

<mosaic_0001>
module attributes {stable_mosaic.version = 11 : i64} {
  func.func @protocomnet_kernel(%arg0: i32, %arg1: memref<16x512xbf16, #tpu.memory_space<vmem>>, %arg2: memref<16x512xbf16, #tpu.memory_space<vmem>>, %arg3: memref<512x256xbf16, #tpu.memory_space<vmem>>, %arg4: memref<512x256xbf16, #tpu.memory_space<vmem>>, %arg5: memref<1x256xf32, #tpu.memory_space<vmem>>, %arg6: memref<256x512xbf16, #tpu.memory_space<vmem>>, %arg7: memref<1x512xf32, #tpu.memory_space<vmem>>, %arg8: memref<512x512xbf16, #tpu.memory_space<vmem>>, %arg9: memref<1x512xf32, #tpu.memory_space<vmem>>, %arg10: memref<16x512xbf16, #tpu.memory_space<vmem>>) attributes {dimension_semantics = [#tpu.dimension_semantics<parallel>], iteration_bounds = array<i64: 1>, scalar_prefetch = 0 : i64, scratch_operands = 0 : i64, tpu.core_type = #tpu.core_type<tc>, window_params = [{transform_indices = @transform_0, window_bounds = array<i64: 16, 512>}, {transform_indices = @transform_1, window_bounds = array<i64: 16, 512>}, {pipeline_mode = #tpu.pipeline_mode<synchronous>, transform_indices = @transform_2, window_bounds = array<i64: 512, 256>}, {pipeline_mode = #tpu.pipeline_mode<synchronous>, transform_indices = @transform_3, window_bounds = array<i64: 512, 256>}, {pipeline_mode = #tpu.pipeline_mode<synchronous>, transform_indices = @transform_4, window_bounds = array<i64: 1, 256>}, {pipeline_mode = #tpu.pipeline_mode<synchronous>, transform_indices = @transform_5, window_bounds = array<i64: 256, 512>}, {pipeline_mode = #tpu.pipeline_mode<synchronous>, transform_indices = @transform_6, window_bounds = array<i64: 1, 512>}, {pipeline_mode = #tpu.pipeline_mode<synchronous>, transform_indices = @transform_7, window_bounds = array<i64: 512, 512>}, {pipeline_mode = #tpu.pipeline_mode<synchronous>, transform_indices = @transform_8, window_bounds = array<i64: 1, 512>}, {transform_indices = @transform_9, window_bounds = array<i64: 16, 512>}]} {
    %c0 = arith.constant 0 : index
    %c0_0 = arith.constant 0 : index
    %0 = vector.load %arg1[%c0, %c0_0] : memref<16x512xbf16, #tpu.memory_space<vmem>>, vector<16x512xbf16>
    %c0_1 = arith.constant 0 : index
    %c0_2 = arith.constant 0 : index
    %1 = vector.load %arg3[%c0_1, %c0_2] : memref<512x256xbf16, #tpu.memory_space<vmem>>, vector<512x256xbf16>
    %cst = arith.constant dense<0.000000e+00> : vector<16x256xf32>
    %2 = tpu.matmul %0, %1, %cst {dimension_numbers = #tpu.dot_dimension_numbers<[1], [0], [0], [1], [0, 0, 1, 1], [], []>} : vector<16x512xbf16>, vector<512x256xbf16>, vector<16x256xf32> -> vector<16x256xf32>
    %c0_3 = arith.constant 0 : index
    %c0_4 = arith.constant 0 : index
    %3 = vector.load %arg2[%c0_3, %c0_4] : memref<16x512xbf16, #tpu.memory_space<vmem>>, vector<16x512xbf16>
    %c0_5 = arith.constant 0 : index
    %c0_6 = arith.constant 0 : index
    %4 = vector.load %arg4[%c0_5, %c0_6] : memref<512x256xbf16, #tpu.memory_space<vmem>>, vector<512x256xbf16>
    %cst_7 = arith.constant dense<0.000000e+00> : vector<16x256xf32>
    %5 = tpu.matmul %3, %4, %cst_7 {dimension_numbers = #tpu.dot_dimension_numbers<[1], [0], [0], [1], [0, 0, 1, 1], [], []>} : vector<16x512xbf16>, vector<512x256xbf16>, vector<16x256xf32> -> vector<16x256xf32>
    %6 = arith.addf %2, %5 : vector<16x256xf32>
    %c0_8 = arith.constant 0 : index
    %c0_9 = arith.constant 0 : index
    %7 = vector.load %arg5[%c0_8, %c0_9] : memref<1x256xf32, #tpu.memory_space<vmem>>, vector<1x256xf32>
    %8 = vector.broadcast %7 : vector<1x256xf32> to vector<16x256xf32>
    %9 = arith.addf %6, %8 : vector<16x256xf32>
    %cst_10 = arith.constant 0.000000e+00 : f32
    %10 = vector.broadcast %cst_10 : f32 to vector<16x256xf32>
    %11 = arith.maximumf %9, %10 : vector<16x256xf32>
    %12 = arith.truncf %11 : vector<16x256xf32> to vector<16x256xbf16>
    %c0_11 = arith.constant 0 : index
    %c0_12 = arith.constant 0 : index
    %13 = vector.load %arg6[%c0_11, %c0_12] : memref<256x512xbf16, #tpu.memory_space<vmem>>, vector<256x512xbf16>
    %cst_13 = arith.constant dense<0.000000e+00> : vector<16x512xf32>
    %14 = tpu.matmul %12, %13, %cst_13 {dimension_numbers = #tpu.dot_dimension_numbers<[1], [0], [0], [1], [0, 0, 1, 1], [], []>} : vector<16x256xbf16>, vector<256x512xbf16>, vector<16x512xf32> -> vector<16x512xf32>
    %c0_14 = arith.constant 0 : index
    %c0_15 = arith.constant 0 : index
    %15 = vector.load %arg7[%c0_14, %c0_15] : memref<1x512xf32, #tpu.memory_space<vmem>>, vector<1x512xf32>
    %16 = vector.broadcast %15 : vector<1x512xf32> to vector<16x512xf32>
    %17 = arith.addf %14, %16 : vector<16x512xf32>
    %cst_16 = arith.constant 0.000000e+00 : f32
    %18 = vector.broadcast %cst_16 : f32 to vector<16x512xf32>
    %19 = arith.maximumf %17, %18 : vector<16x512xf32>
    %20 = arith.truncf %19 : vector<16x512xf32> to vector<16x512xbf16>
    %c0_17 = arith.constant 0 : index
    %c0_18 = arith.constant 0 : index
    %21 = vector.load %arg8[%c0_17, %c0_18] : memref<512x512xbf16, #tpu.memory_space<vmem>>, vector<512x512xbf16>
    %cst_19 = arith.constant dense<0.000000e+00> : vector<16x512xf32>
    %22 = tpu.matmul %20, %21, %cst_19 {dimension_numbers = #tpu.dot_dimension_numbers<[1], [0], [0], [1], [0, 0, 1, 1], [], []>} : vector<16x512xbf16>, vector<512x512xbf16>, vector<16x512xf32> -> vector<16x512xf32>
    %c0_20 = arith.constant 0 : index
    %c0_21 = arith.constant 0 : index
    %23 = vector.load %arg9[%c0_20, %c0_21] : memref<1x512xf32, #tpu.memory_space<vmem>>, vector<1x512xf32>
    %24 = vector.broadcast %23 : vector<1x512xf32> to vector<16x512xf32>
    %25 = arith.addf %22, %24 : vector<16x512xf32>
    %26 = arith.truncf %25 : vector<16x512xf32> to vector<16x512xbf16>
    %c0_22 = arith.constant 0 : index
    %c0_23 = arith.constant 0 : index
    %27 = vector.load %arg10[%c0_22, %c0_23] : memref<16x512xbf16, #tpu.memory_space<vmem>>, vector<16x512xbf16>
    tpu.vector_store %arg10[%c0_22, %c0_23], %26 {strides = array<i32>} : memref<16x512xbf16, #tpu.memory_space<vmem>>, vector<16x512xbf16>,
    return
  }
  func.func @transform_0(%arg0: i32) -> (i32, i32) {
    %c0_i32 = arith.constant 0 : i32
    %c0_i32_0 = arith.constant 0 : i32
    return %arg0, %c0_i32 : i32, i32
  }
  func.func @transform_1(%arg0: i32) -> (i32, i32) {
    %c0_i32 = arith.constant 0 : i32
    %c0_i32_0 = arith.constant 0 : i32
    return %arg0, %c0_i32 : i32, i32
  }
  func.func @transform_2(%arg0: i32) -> (i32, i32) {
    %c0_i32 = arith.constant 0 : i32
    %c0_i32_0 = arith.constant 0 : i32
    %c0_i32_1 = arith.constant 0 : i32
    return %c0_i32, %c0_i32_0 : i32, i32
  }
  func.func @transform_3(%arg0: i32) -> (i32, i32) {
    %c0_i32 = arith.constant 0 : i32
    %c0_i32_0 = arith.constant 0 : i32
    %c0_i32_1 = arith.constant 0 : i32
    return %c0_i32, %c0_i32_0 : i32, i32
  }
  func.func @transform_4(%arg0: i32) -> (i32, i32) {
    %c0_i32 = arith.constant 0 : i32
    %c0_i32_0 = arith.constant 0 : i32
    %c0_i32_1 = arith.constant 0 : i32
    return %c0_i32, %c0_i32_0 : i32, i32
  }
  func.func @transform_5(%arg0: i32) -> (i32, i32) {
    %c0_i32 = arith.constant 0 : i32
    %c0_i32_0 = arith.constant 0 : i32
    %c0_i32_1 = arith.constant 0 : i32
    return %c0_i32, %c0_i32_0 : i32, i32
  }
  func.func @transform_6(%arg0: i32) -> (i32, i32) {
    %c0_i32 = arith.constant 0 : i32
    %c0_i32_0 = arith.constant 0 : i32
    %c0_i32_1 = arith.constant 0 : i32
    return %c0_i32, %c0_i32_0 : i32, i32
  }
  func.func @transform_7(%arg0: i32) -> (i32, i32) {
    %c0_i32 = arith.constant 0 : i32
    %c0_i32_0 = arith.constant 0 : i32
    %c0_i32_1 = arith.constant 0 : i32
    return %c0_i32, %c0_i32_0 : i32, i32
  }
  func.func @transform_8(%arg0: i32) -> (i32, i32) {
    %c0_i32 = arith.constant 0 : i32
    %c0_i32_0 = arith.constant 0 : i32
    %c0_i32_1 = arith.constant 0 : i32
    return %c0_i32, %c0_i32_0 : i32, i32
  }
  func.func @transform_9(%arg0: i32) -> (i32, i32) {
    %c0_i32 = arith.constant 0 : i32
    %c0_i32_0 = arith.constant 0 : i32
    return %arg0, %c0_i32 : i32, i32
  }
}

</mosaic_0001>

<llo_original>
// kernel: tpu_custom_call.1
$region0: #{tpu_custom_call.1}
  #allocation0 [shape = 'u32[]', space=smem, size = 0x4, offset = 0x4, fixed_abs, tag = 'smem constant byte address 0x4 - core index']
  #allocation1 [shape = 'u32[144,128]{1,0:T(1,128)}', space=vmem, size = 0x12000, scoped, tag = 'internal scratch']
  %s0 = inlined_call_operand.hbm [shape: bf16[8,512], index: 0, kind: input, shape index: {}]
  %s1 = inlined_call_operand.hbm [shape: bf16[8,512], index: 1, kind: input, shape index: {}]
  %s2 = inlined_call_operand.hbm [shape: bf16[512,256], index: 2, kind: input, shape index: {}]
  %s3 = inlined_call_operand.hbm [shape: bf16[512,256], index: 3, kind: input, shape index: {}]
  %s4 = inlined_call_operand.hbm [shape: f32[1,256], index: 4, kind: input, shape index: {}]
  %s5 = inlined_call_operand.hbm [shape: bf16[256,512], index: 5, kind: input, shape index: {}]
  %s6 = inlined_call_operand.vmem [shape: f32[1,512], index: 6, kind: input, shape index: {}]
  %s7 = inlined_call_operand.hbm [shape: bf16[512,512], index: 7, kind: input, shape index: {}]
  %s8 = inlined_call_operand.vmem [shape: f32[1,512], index: 8, kind: input, shape index: {}]
  %s9 = inlined_call_operand.hbm [shape: bf16[8,512], index: 9, kind: output, shape index: {}]
  %s10 = sld [smem:[#allocation0]]
  $region74: #{tpu_custom_call.1} parent=0
    _
  %s12 = ssub.s32 1, %s10
  %s13 = scalar_select 0, %s12, %s10
  $region1: #{tpu_custom_call.1} parent=0
    #allocation2 [shape = 'u8[16384]{0}', space=vmem, size = 0x4000, scoped, tag = 'input window, operand 0, single buffered']
    #allocation3 [shape = 's32[1]{0}', space=sflag, size = 0x4, scoped, tag = 'scoped memory for tpu_custom_call.1']
    #allocation4 [shape = 's32[1]{0}', space=sflag, size = 0x4, scoped, tag = 'scoped memory for tpu_custom_call.1']
    #allocation5 [shape = 'u8[16384]{0}', space=vmem, size = 0x4000, scoped, tag = 'input window, operand 1, single buffered']
    #allocation6 [shape = 's32[1]{0}', space=sflag, size = 0x4, scoped, tag = 'scoped memory for tpu_custom_call.1']
    #allocation7 [shape = 'u8[262144]{0}', space=vmem, size = 0x40000, scoped, tag = 'input window, operand 2, single buffered']
    #allocation8 [shape = 'u8[262144]{0}', space=vmem, size = 0x40000, scoped, tag = 'input window, operand 3, single buffered']
    #allocation9 [shape = 's32[1]{0}', space=sflag, size = 0x4, scoped, tag = 'scoped memory for tpu_custom_call.1']
    #allocation10 [shape = 'u8[1024]{0}', space=vmem, size = 0x400, scoped, tag = 'input window, operand 4, single buffered']
    #allocation11 [shape = 'u8[262144]{0}', space=vmem, size = 0x40000, scoped, tag = 'input window, operand 5, single buffered']
    #allocation12 [shape = 's32[1]{0}', space=sflag, size = 0x4, scoped, tag = 'scoped memory for tpu_custom_call.1']
    #allocation13 [shape = 'u8[524288]{0}', space=vmem, size = 0x80000, scoped, tag = 'input window, operand 7, single buffered']
    #allocation14 [shape = 'u8[16384]{0}', space=vmem, size = 0x4000, scoped, tag = 'output window, operand 0, single buffered']
    %14 = vsyncpa [#allocation3], 0
    %15 = vsyncpa [#allocation6], 0
    %16 = vsyncpa [#allocation9], 0
    %17 = vsyncpa [#allocation12], 0
    %18 = vsyncpa [#allocation4], 0
    // Predicated region
    $region2: #{tpu_custom_call.1} parent=1 // pred_check
      _
    $region3: #{tpu_custom_call.1} parent=1 // pred_check_branch
      %20 = sbr.rel (0) target = $region5
    $region4: #{tpu_custom_call.1} parent=1 // pred_region
      %s22 = ssub.s32 512, 256
      %23 = vsyncadd [#allocation3], %s22
      %s24 = sshll.u32 [#allocation2], 4
      %s25 = int_to_ptr.vmem [resolvable:$true] %s24
      %30 = dma.hbm_to_vmem [thread:$0]  %s0, 256, %s25, [#allocation3], 256, 256, 16
    $region5: #{tpu_custom_call.1} parent=1 // pred_fallthru
      _
    // Predicated region
    $region6: #{tpu_custom_call.1} parent=1 // pred_check
      _
    $region7: #{tpu_custom_call.1} parent=1 // pred_check_branch
      %32 = sbr.rel (0) target = $region9
    $region8: #{tpu_custom_call.1} parent=1 // pred_region
      %s34 = ssub.s32 512, 256
      %35 = vsyncadd [#allocation6], %s34
      %s36 = sshll.u32 [#allocation5], 4
      %s37 = int_to_ptr.vmem [resolvable:$true] %s36
      %42 = dma.hbm_to_vmem [thread:$0]  %s1, 256, %s37, [#allocation6], 256, 256, 16
    $region9: #{tpu_custom_call.1} parent=1 // pred_fallthru
      _
    // Predicated region
    $region10: #{tpu_custom_call.1} parent=1 // pred_check
      _
    $region11: #{tpu_custom_call.1} parent=1 // pred_check_branch
      %44 = sbr.rel (0) target = $region13
    $region12: #{tpu_custom_call.1} parent=1 // pred_region
      %s46 = ssub.s32 8192, 8192
      %47 = vsyncadd [#allocation6], %s46
      %s48 = sshll.u32 [#allocation7], 4
      %s49 = int_to_ptr.vmem [resolvable:$true] %s48
      %54 = dma.hbm_to_vmem [thread:$0]  %s2, 8192, %s49, [#allocation6], 128, 128, 8
    $region13: #{tpu_custom_call.1} parent=1 // pred_fallthru
      _
    // Predicated region
    $region14: #{tpu_custom_call.1} parent=1 // pred_check
      _
    $region15: #{tpu_custom_call.1} parent=1 // pred_check_branch
      %56 = sbr.rel (0) target = $region17
    $region16: #{tpu_custom_call.1} parent=1 // pred_region
      %s58 = ssub.s32 8192, 8192
      %59 = vsyncadd [#allocation9], %s58
      %s60 = sshll.u32 [#allocation8], 4
      %s61 = int_to_ptr.vmem [resolvable:$true] %s60
      %66 = dma.hbm_to_vmem [thread:$0]  %s3, 8192, %s61, [#allocation9], 128, 128, 8
    $region17: #{tpu_custom_call.1} parent=1 // pred_fallthru
      _
    // Predicated region
    $region18: #{tpu_custom_call.1} parent=1 // pred_check
      _
    $region19: #{tpu_custom_call.1} parent=1 // pred_check_branch
      %68 = sbr.rel (0) target = $region21
    $region20: #{tpu_custom_call.1} parent=1 // pred_region
      %s70 = ssub.s32 32, 32
      %71 = vsyncadd [#allocation9], %s70
      %s73 = sshll.u32 [#allocation10], 4
      %s74 = int_to_ptr.vmem [resolvable:$true] %s73
      %76 = dma.hbm_to_vmem [thread:$0]  %s4, 32, %s74, [#allocation9]
    $region21: #{tpu_custom_call.1} parent=1 // pred_fallthru
      _
    // Predicated region
    $region22: #{tpu_custom_call.1} parent=1 // pred_check
      _
    $region23: #{tpu_custom_call.1} parent=1 // pred_check_branch
      %78 = sbr.rel (0) target = $region25
    $region24: #{tpu_custom_call.1} parent=1 // pred_region
      %s80 = ssub.s32 8192, 8192
      %81 = vsyncadd [#allocation12], %s80
      %s82 = sshll.u32 [#allocation11], 4
      %s83 = int_to_ptr.vmem [resolvable:$true] %s82
      %88 = dma.hbm_to_vmem [thread:$0]  %s5, 8192, %s83, [#allocation12], 256, 256, 16
    $region25: #{tpu_custom_call.1} parent=1 // pred_fallthru
      _
    // Predicated region
    $region26: #{tpu_custom_call.1} parent=1 // pred_check
      _
    $region27: #{tpu_custom_call.1} parent=1 // pred_check_branch
      %90 = sbr.rel (0) target = $region29
    $region28: #{tpu_custom_call.1} parent=1 // pred_region
      _
    $region29: #{tpu_custom_call.1} parent=1 // pred_fallthru
      _
    // Predicated region
    $region30: #{tpu_custom_call.1} parent=1 // pred_check
      _
    $region31: #{tpu_custom_call.1} parent=1 // pred_check_branch
      %92 = sbr.rel (0) target = $region33
    $region32: #{tpu_custom_call.1} parent=1 // pred_region
      %s94 = ssub.s32 16384, 16384
      %95 = vsyncadd [#allocation12], %s94
      %s96 = sshll.u32 [#allocation13], 4
      %s97 = int_to_ptr.vmem [resolvable:$true] %s96
      %102 = dma.hbm_to_vmem [thread:$0]  %s7, 16384, %s97, [#allocation12], 256, 256, 16
    $region33: #{tpu_custom_call.1} parent=1 // pred_fallthru
      _
    // Predicated region
    $region34: #{tpu_custom_call.1} parent=1 // pred_check
      _
    $region35: #{tpu_custom_call.1} parent=1 // pred_check_branch
      %104 = sbr.rel (0) target = $region37
    $region36: #{tpu_custom_call.1} parent=1 // pred_region
      _
    $region37: #{tpu_custom_call.1} parent=1 // pred_fallthru
      _
    // Predicated region
    $region38: #{tpu_custom_call.1} parent=1 // pred_check
      _
    $region39: #{tpu_custom_call.1} parent=1 // pred_check_branch
      %106 = sbr.rel (0) target = $region41
    $region40: #{tpu_custom_call.1} parent=1 // pred_region
      %107 = dma.done [#allocation3], 512
    $region41: #{tpu_custom_call.1} parent=1 // pred_fallthru
      _
    // Predicated region
    $region42: #{tpu_custom_call.1} parent=1 // pred_check
      _
    $region43: #{tpu_custom_call.1} parent=1 // pred_check_branch
      %109 = sbr.rel (0) target = $region45
    $region44: #{tpu_custom_call.1} parent=1 // pred_region
      %110 = dma.done [#allocation6], 512
    $region45: #{tpu_custom_call.1} parent=1 // pred_fallthru
      _
    // Predicated region
    $region46: #{tpu_custom_call.1} parent=1 // pred_check
      _
    $region47: #{tpu_custom_call.1} parent=1 // pred_check_branch
      %112 = sbr.rel (0) target = $region49
    $region48: #{tpu_custom_call.1} parent=1 // pred_region
      %113 = dma.done [#allocation6], 8192
    $region49: #{tpu_custom_call.1} parent=1 // pred_fallthru
      _
    // Predicated region
    $region50: #{tpu_custom_call.1} parent=1 // pred_check
      _
    $region51: #{tpu_custom_call.1} parent=1 // pred_check_branch
      %115 = sbr.rel (0) target = $region53
    $region52: #{tpu_custom_call.1} parent=1 // pred_region
      %116 = dma.done [#allocation9], 8192
    $region53: #{tpu_custom_call.1} parent=1 // pred_fallthru
      _
    // Predicated region
    $region54: #{tpu_custom_call.1} parent=1 // pred_check
      _
    $region55: #{tpu_custom_call.1} parent=1 // pred_check_branch
      %118 = sbr.rel (0) target = $region57
    $region56: #{tpu_custom_call.1} parent=1 // pred_region
      %119 = dma.done [#allocation9], 32
    $region57: #{tpu_custom_call.1} parent=1 // pred_fallthru
      _
    // Predicated region
    $region58: #{tpu_custom_call.1} parent=1 // pred_check
      _
    $region59: #{tpu_custom_call.1} parent=1 // pred_check_branch
      %121 = sbr.rel (0) target = $region61
    $region60: #{tpu_custom_call.1} parent=1 // pred_region
      %122 = dma.done [#allocation12], 8192
    $region61: #{tpu_custom_call.1} parent=1 // pred_fallthru
      _
    // Predicated region
    $region62: #{tpu_custom_call.1} parent=1 // pred_check
      _
    $region63: #{tpu_custom_call.1} parent=1 // pred_check_branch
      %124 = sbr.rel (0) target = $region65
    $region64: #{tpu_custom_call.1} parent=1 // pred_region
      %125 = dma.done [#allocation12], 16384
    $region65: #{tpu_custom_call.1} parent=1 // pred_fallthru
      _
    %v126 = vld [vmem:[#allocation2] sm:$0xff]
    %v127 = vld [vmem:[#allocation2 + $0x8] sm:$0xff]
    %v128 = vld [vmem:[#allocation2 + $0x10] sm:$0xff]
    %v129 = vld [vmem:[#allocation2 + $0x18] sm:$0xff]
    %v130 = vld [vmem:[#allocation7] sm:$0xff]
    %v131 = vld [vmem:[#allocation7 + $0x8] sm:$0xff]
    %v132 = vld [vmem:[#allocation7 + $0x10] sm:$0xff]
    %v133 = vld [vmem:[#allocation7 + $0x18] sm:$0xff]
    %v134 = vld [vmem:[#allocation7 + $0x20] sm:$0xff]
    %v135 = vld [vmem:[#allocation7 + $0x28] sm:$0xff]
    %v136 = vld [vmem:[#allocation7 + $0x30] sm:$0xff]
    %v137 = vld [vmem:[#allocation7 + $0x38] sm:$0xff]
    %v138 = vld [vmem:[#allocation7 + $0x40] sm:$0xff]
    %v139 = vld [vmem:[#allocation7 + $0x48] sm:$0xff]
    %v140 = vld [vmem:[#allocation7 + $0x50] sm:$0xff]
    %v141 = vld [vmem:[#allocation7 + $0x58] sm:$0xff]
    %v142 = vld [vmem:[#allocation7 + $0x60] sm:$0xff]
    %v143 = vld [vmem:[#allocation7 + $0x68] sm:$0xff]
    %v144 = vld [vmem:[#allocation7 + $0x70] sm:$0xff]
    %v145 = vld [vmem:[#allocation7 + $0x78] sm:$0xff]
    %v146 = vld [vmem:[#allocation7 + $0x80] sm:$0xff]
    %v147 = vld [vmem:[#allocation7 + $0x88] sm:$0xff]
    %v148 = vld [vmem:[#allocation7 + $0x90] sm:$0xff]
    %v149 = vld [vmem:[#allocation7 + $0x98] sm:$0xff]
    %v150 = vld [vmem:[#allocation7 + $0xa0] sm:$0xff]
    %v151 = vld [vmem:[#allocation7 + $0xa8] sm:$0xff]
    %v152 = vld [vmem:[#allocation7 + $0xb0] sm:$0xff]
    %v153 = vld [vmem:[#allocation7 + $0xb8] sm:$0xff]
    %v154 = vld [vmem:[#allocation7 + $0xc0] sm:$0xff]
    %v155 = vld [vmem:[#allocation7 + $0xc8] sm:$0xff]
    %v156 = vld [vmem:[#allocation7 + $0xd0] sm:$0xff]
    %v157 = vld [vmem:[#allocation7 + $0xd8] sm:$0xff]
    %v158 = vld [vmem:[#allocation7 + $0xe0] sm:$0xff]
    %v159 = vld [vmem:[#allocation7 + $0xe8] sm:$0xff]
    %v160 = vld [vmem:[#allocation7 + $0xf0] sm:$0xff]
    %v161 = vld [vmem:[#allocation7 + $0xf8] sm:$0xff]
    %v162 = vld [vmem:[#allocation7 + $0x100] sm:$0xff]
    %v163 = vld [vmem:[#allocation7 + $0x108] sm:$0xff]
    %v164 = vld [vmem:[#allocation7 + $0x110] sm:$0xff]
    %v165 = vld [vmem:[#allocation7 + $0x118] sm:$0xff]
    %v166 = vld [vmem:[#allocation7 + $0x120] sm:$0xff]
    %v167 = vld [vmem:[#allocation7 + $0x128] sm:$0xff]
    %v168 = vld [vmem:[#allocation7 + $0x130] sm:$0xff]
    %v169 = vld [vmem:[#allocation7 + $0x138] sm:$0xff]
    %v170 = vld [vmem:[#allocation7 + $0x140] sm:$0xff]
    %v171 = vld [vmem:[#allocation7 + $0x148] sm:$0xff]
    %v172 = vld [vmem:[#allocation7 + $0x150] sm:$0xff]
    %v173 = vld [vmem:[#allocation7 + $0x158] sm:$0xff]
    %v174 = vld [vmem:[#allocation7 + $0x160] sm:$0xff]
    %v175 = vld [vmem:[#allocation7 + $0x168] sm:$0xff]
    %v176 = vld [vmem:[#allocation7 + $0x170] sm:$0xff]
    %v177 = vld [vmem:[#allocation7 + $0x178] sm:$0xff]
    %v178 = vld [vmem:[#allocation7 + $0x180] sm:$0xff]
    %v179 = vld [vmem:[#allocation7 + $0x188] sm:$0xff]
    %v180 = vld [vmem:[#allocation7 + $0x190] sm:$0xff]
    %v181 = vld [vmem:[#allocation7 + $0x198] sm:$0xff]
    %v182 = vld [vmem:[#allocation7 + $0x1a0] sm:$0xff]
    %v183 = vld [vmem:[#allocation7 + $0x1a8] sm:$0xff]
    %v184 = vld [vmem:[#allocation7 + $0x1b0] sm:$0xff]
    %v185 = vld [vmem:[#allocation7 + $0x1b8] sm:$0xff]
    %v186 = vld [vmem:[#allocation7 + $0x1c0] sm:$0xff]
    %v187 = vld [vmem:[#allocation7 + $0x1c8] sm:$0xff]
    %v188 = vld [vmem:[#allocation7 + $0x1d0] sm:$0xff]
    %v189 = vld [vmem:[#allocation7 + $0x1d8] sm:$0xff]
    %v190 = vld [vmem:[#allocation7 + $0x1e0] sm:$0xff]
    %v191 = vld [vmem:[#allocation7 + $0x1e8] sm:$0xff]
    %v192 = vld [vmem:[#allocation7 + $0x1f0] sm:$0xff]
    %v193 = vld [vmem:[#allocation7 + $0x1f8] sm:$0xff]
    %v194 = vld [vmem:[#allocation5] sm:$0xff]
    %v195 = vld [vmem:[#allocation5 + $0x8] sm:$0xff]
    %v196 = vld [vmem:[#allocation5 + $0x10] sm:$0xff]
    %v197 = vld [vmem:[#allocation5 + $0x18] sm:$0xff]
    %v198 = vld [vmem:[#allocation8] sm:$0xff]
    %v199 = vld [vmem:[#allocation8 + $0x8] sm:$0xff]
    %v200 = vld [vmem:[#allocation8 + $0x10] sm:$0xff]
    %v201 = vld [vmem:[#allocation8 + $0x18] sm:$0xff]
    %v202 = vld [vmem:[#allocation8 + $0x20] sm:$0xff]
    %v203 = vld [vmem:[#allocation8 + $0x28] sm:$0xff]
    %v204 = vld [vmem:[#allocation8 + $0x30] sm:$0xff]
    %v205 = vld [vmem:[#allocation8 + $0x38] sm:$0xff]
    %v206 = vld [vmem:[#allocation8 + $0x40] sm:$0xff]
    %v207 = vld [vmem:[#allocation8 + $0x48] sm:$0xff]
    %v208 = vld [vmem:[#allocation8 + $0x50] sm:$0xff]
    %v209 = vld [vmem:[#allocation8 + $0x58] sm:$0xff]
    %v210 = vld [vmem:[#allocation8 + $0x60] sm:$0xff]
    %v211 = vld [vmem:[#allocation8 + $0x68] sm:$0xff]
    %v212 = vld [vmem:[#allocation8 + $0x70] sm:$0xff]
    %v213 = vld [vmem:[#allocation8 + $0x78] sm:$0xff]
    %v214 = vld [vmem:[#allocation8 + $0x80] sm:$0xff]
    %v215 = vld [vmem:[#allocation8 + $0x88] sm:$0xff]
    %v216 = vld [vmem:[#allocation8 + $0x90] sm:$0xff]
    %v217 = vld [vmem:[#allocation8 + $0x98] sm:$0xff]
    %v218 = vld [vmem:[#allocation8 + $0xa0] sm:$0xff]
    %v219 = vld [vmem:[#allocation8 + $0xa8] sm:$0xff]
    %v220 = vld [vmem:[#allocation8 + $0xb0] sm:$0xff]
    %v221 = vld [vmem:[#allocation8 + $0xb8] sm:$0xff]
    %v222 = vld [vmem:[#allocation8 + $0xc0] sm:$0xff]
    %v223 = vld [vmem:[#allocation8 + $0xc8] sm:$0xff]
    %v224 = vld [vmem:[#allocation8 + $0xd0] sm:$0xff]
    %v225 = vld [vmem:[#allocation8 + $0xd8] sm:$0xff]
    %v226 = vld [vmem:[#allocation8 + $0xe0] sm:$0xff]
    %v227 = vld [vmem:[#allocation8 + $0xe8] sm:$0xff]
    %v228 = vld [vmem:[#allocation8 + $0xf0] sm:$0xff]
    %v229 = vld [vmem:[#allocation8 + $0xf8] sm:$0xff]
    %v230 = vld [vmem:[#allocation8 + $0x100] sm:$0xff]
    %v231 = vld [vmem:[#allocation8 + $0x108] sm:$0xff]
    %v232 = vld [vmem:[#allocation8 + $0x110] sm:$0xff]
    %v233 = vld [vmem:[#allocation8 + $0x118] sm:$0xff]
    %v234 = vld [vmem:[#allocation8 + $0x120] sm:$0xff]
    %v235 = vld [vmem:[#allocation8 + $0x128] sm:$0xff]
    %v236 = vld [vmem:[#allocation8 + $0x130] sm:$0xff]
    %v237 = vld [vmem:[#allocation8 + $0x138] sm:$0xff]
    %v238 = vld [vmem:[#allocation8 + $0x140] sm:$0xff]
    %v239 = vld [vmem:[#allocation8 + $0x148] sm:$0xff]
    %v240 = vld [vmem:[#allocation8 + $0x150] sm:$0xff]
    %v241 = vld [vmem:[#allocation8 + $0x158] sm:$0xff]
    %v242 = vld [vmem:[#allocation8 + $0x160] sm:$0xff]
    %v243 = vld [vmem:[#allocation8 + $0x168] sm:$0xff]
    %v244 = vld [vmem:[#allocation8 + $0x170] sm:$0xff]
    %v245 = vld [vmem:[#allocation8 + $0x178] sm:$0xff]
    %v246 = vld [vmem:[#allocation8 + $0x180] sm:$0xff]
    %v247 = vld [vmem:[#allocation8 + $0x188] sm:$0xff]
    %v248 = vld [vmem:[#allocation8 + $0x190] sm:$0xff]
    %v249 = vld [vmem:[#allocation8 + $0x198] sm:$0xff]
    %v250 = vld [vmem:[#allocation8 + $0x1a0] sm:$0xff]
    %v251 = vld [vmem:[#allocation8 + $0x1a8] sm:$0xff]
    %v252 = vld [vmem:[#allocation8 + $0x1b0] sm:$0xff]
    %v253 = vld [vmem:[#allocation8 + $0x1b8] sm:$0xff]
    %v254 = vld [vmem:[#allocation8 + $0x1c0] sm:$0xff]
    %v255 = vld [vmem:[#allocation8 + $0x1c8] sm:$0xff]
    %v256 = vld [vmem:[#allocation8 + $0x1d0] sm:$0xff]
    %v257 = vld [vmem:[#allocation8 + $0x1d8] sm:$0xff]
    %v258 = vld [vmem:[#allocation8 + $0x1e0] sm:$0xff]
    %v259 = vld [vmem:[#allocation8 + $0x1e8] sm:$0xff]
    %v260 = vld [vmem:[#allocation8 + $0x1f0] sm:$0xff]
    %v261 = vld [vmem:[#allocation8 + $0x1f8] sm:$0xff]
    %v266 = vunpack.c.l.b16 %v194
    %v267 = vunpack.c.h.b16 %v194
    %v268 = vunpack.c.l.b16 %v195
    %v269 = vunpack.c.h.b16 %v195
    %v270 = vunpack.c.l.b16 %v196
    %v271 = vunpack.c.h.b16 %v196
    %v272 = vunpack.c.l.b16 %v197
    %v273 = vunpack.c.h.b16 %v197
    %v274 = vpack.c.b16 %v270, %v266
    %v275 = vpack.c.b16 %v271, %v267
    %v276 = vpack.c.b16 %v272, %v268
    %v277 = vpack.c.b16 %v273, %v269
    %v346 = vunpack.c.l.b16 %v198
    %v347 = vunpack.c.h.b16 %v198
    %v348 = vunpack.c.l.b16 %v199
    %v349 = vunpack.c.h.b16 %v199
    %v350 = vunpack.c.l.b16 %v200
    %v351 = vunpack.c.h.b16 %v200
    %v352 = vunpack.c.l.b16 %v201
    %v353 = vunpack.c.h.b16 %v201
    %v354 = vunpack.c.l.b16 %v202
    %v355 = vunpack.c.h.b16 %v202
    %v356 = vunpack.c.l.b16 %v203
    %v357 = vunpack.c.h.b16 %v203
    %v358 = vunpack.c.l.b16 %v204
    %v359 = vunpack.c.h.b16 %v204
    %v360 = vunpack.c.l.b16 %v205
    %v361 = vunpack.c.h.b16 %v205
    %v362 = vunpack.c.l.b16 %v206
    %v363 = vunpack.c.h.b16 %v206
    %v364 = vunpack.c.l.b16 %v207
    %v365 = vunpack.c.h.b16 %v207
    %v366 = vunpack.c.l.b16 %v208
    %v367 = vunpack.c.h.b16 %v208
    %v368 = vunpack.c.l.b16 %v209
    %v369 = vunpack.c.h.b16 %v209
    %v370 = vunpack.c.l.b16 %v210
    %v371 = vunpack.c.h.b16 %v210
    %v372 = vunpack.c.l.b16 %v211
    %v373 = vunpack.c.h.b16 %v211
    %v374 = vunpack.c.l.b16 %v212
    %v375 = vunpack.c.h.b16 %v212
    %v376 = vunpack.c.l.b16 %v213
    %v377 = vunpack.c.h.b16 %v213
    %v378 = vunpack.c.l.b16 %v214
    %v379 = vunpack.c.h.b16 %v214
    %v380 = vunpack.c.l.b16 %v215
    %v381 = vunpack.c.h.b16 %v215
    %v382 = vunpack.c.l.b16 %v216
    %v383 = vunpack.c.h.b16 %v216
    %v384 = vunpack.c.l.b16 %v217
    %v385 = vunpack.c.h.b16 %v217
    %v386 = vunpack.c.l.b16 %v218
    %v387 = vunpack.c.h.b16 %v218
    %v388 = vunpack.c.l.b16 %v219
    %v389 = vunpack.c.h.b16 %v219
    %v390 = vunpack.c.l.b16 %v220
    %v391 = vunpack.c.h.b16 %v220
    %v392 = vunpack.c.l.b16 %v221
    %v393 = vunpack.c.h.b16 %v221
    %v394 = vunpack.c.l.b16 %v222
    %v395 = vunpack.c.h.b16 %v222
    %v396 = vunpack.c.l.b16 %v223
    %v397 = vunpack.c.h.b16 %v223
    %v398 = vunpack.c.l.b16 %v224
    %v399 = vunpack.c.h.b16 %v224
    %v400 = vunpack.c.l.b16 %v225
    %v401 = vunpack.c.h.b16 %v225
    %v402 = vunpack.c.l.b16 %v226
    %v403 = vunpack.c.h.b16 %v226
    %v404 = vunpack.c.l.b16 %v227
    %v405 = vunpack.c.h.b16 %v227
    %v406 = vunpack.c.l.b16 %v228
    %v407 = vunpack.c.h.b16 %v228
    %v408 = vunpack.c.l.b16 %v229
    %v409 = vunpack.c.h.b16 %v229
    %v410 = vunpack.c.l.b16 %v230
    %v411 = vunpack.c.h.b16 %v230
    %v412 = vunpack.c.l.b16 %v231
    %v413 = vunpack.c.h.b16 %v231
    %v414 = vunpack.c.l.b16 %v232
    %v415 = vunpack.c.h.b16 %v232
    %v416 = vunpack.c.l.b16 %v233
    %v417 = vunpack.c.h.b16 %v233
    %v418 = vunpack.c.l.b16 %v234
    %v419 = vunpack.c.h.b16 %v234
    %v420 = vunpack.c.l.b16 %v235
    %v421 = vunpack.c.h.b16 %v235
    %v422 = vunpack.c.l.b16 %v236
    %v423 = vunpack.c.h.b16 %v236
    %v424 = vunpack.c.l.b16 %v237
    %v425 = vunpack.c.h.b16 %v237
    %v426 = vunpack.c.l.b16 %v238
    %v427 = vunpack.c.h.b16 %v238
    %v428 = vunpack.c.l.b16 %v239
    %v429 = vunpack.c.h.b16 %v239
    %v430 = vunpack.c.l.b16 %v240
    %v431 = vunpack.c.h.b16 %v240
    %v432 = vunpack.c.l.b16 %v241
    %v433 = vunpack.c.h.b16 %v241
    %v434 = vunpack.c.l.b16 %v242
    %v435 = vunpack.c.h.b16 %v242
    %v436 = vunpack.c.l.b16 %v243
    %v437 = vunpack.c.h.b16 %v243
    %v438 = vunpack.c.l.b16 %v244
    %v439 = vunpack.c.h.b16 %v244
    %v440 = vunpack.c.l.b16 %v245
    %v441 = vunpack.c.h.b16 %v245
    %v442 = vunpack.c.l.b16 %v246
    %v443 = vunpack.c.h.b16 %v246
    %v444 = vunpack.c.l.b16 %v247
    %v445 = vunpack.c.h.b16 %v247
    %v446 = vunpack.c.l.b16 %v248
    %v447 = vunpack.c.h.b16 %v248
    %v448 = vunpack.c.l.b16 %v249
    %v449 = vunpack.c.h.b16 %v249
    %v450 = vunpack.c.l.b16 %v250
    %v451 = vunpack.c.h.b16 %v250
    %v452 = vunpack.c.l.b16 %v251
    %v453 = vunpack.c.h.b16 %v251
    %v454 = vunpack.c.l.b16 %v252
    %v455 = vunpack.c.h.b16 %v252
    %v456 = vunpack.c.l.b16 %v253
    %v457 = vunpack.c.h.b16 %v253
    %v458 = vunpack.c.l.b16 %v254
    %v459 = vunpack.c.h.b16 %v254
    %v460 = vunpack.c.l.b16 %v255
    %v461 = vunpack.c.h.b16 %v255
    %v462 = vunpack.c.l.b16 %v256
    %v463 = vunpack.c.h.b16 %v256
    %v464 = vunpack.c.l.b16 %v257
    %v465 = vunpack.c.h.b16 %v257
    %v466 = vunpack.c.l.b16 %v258
    %v467 = vunpack.c.h.b16 %v258
    %v468 = vunpack.c.l.b16 %v259
    %v469 = vunpack.c.h.b16 %v259
    %v470 = vunpack.c.l.b16 %v260
    %v471 = vunpack.c.h.b16 %v260
    %v472 = vunpack.c.l.b16 %v261
    %v473 = vunpack.c.h.b16 %v261
    %v474 = vpack.c.b16 %v348, %v346
    %v475 = vpack.c.b16 %v349, %v347
    %v476 = vpack.c.b16 %v352, %v350
    %v477 = vpack.c.b16 %v353, %v351
    %v478 = vpack.c.b16 %v356, %v354
    %v479 = vpack.c.b16 %v357, %v355
    %v480 = vpack.c.b16 %v360, %v358
    %v481 = vpack.c.b16 %v361, %v359
    %v482 = vpack.c.b16 %v364, %v362
    %v483 = vpack.c.b16 %v365, %v363
    %v484 = vpack.c.b16 %v368, %v366
    %v485 = vpack.c.b16 %v369, %v367
    %v486 = vpack.c.b16 %v372, %v370
    %v487 = vpack.c.b16 %v373, %v371
    %v488 = vpack.c.b16 %v376, %v374
    %v489 = vpack.c.b16 %v377, %v375
    %v490 = vpack.c.b16 %v380, %v378
    %v491 = vpack.c.b16 %v381, %v379
    %v492 = vpack.c.b16 %v384, %v382
    %v493 = vpack.c.b16 %v385, %v383
    %v494 = vpack.c.b16 %v388, %v386
    %v495 = vpack.c.b16 %v389, %v387
    %v496 = vpack.c.b16 %v392, %v390
    %v497 = vpack.c.b16 %v393, %v391
    %v498 = vpack.c.b16 %v396, %v394
    %v499 = vpack.c.b16 %v397, %v395
    %v500 = vpack.c.b16 %v400, %v398
    %v501 = vpack.c.b16 %v401, %v399
    %v502 = vpack.c.b16 %v404, %v402
    %v503 = vpack.c.b16 %v405, %v403
    %v504 = vpack.c.b16 %v408, %v406
    %v505 = vpack.c.b16 %v409, %v407
    %v506 = vpack.c.b16 %v412, %v410
    %v507 = vpack.c.b16 %v413, %v411
    %v508 = vpack.c.b16 %v416, %v414
    %v509 = vpack.c.b16 %v417, %v415
    %v510 = vpack.c.b16 %v420, %v418
    %v511 = vpack.c.b16 %v421, %v419
    %v512 = vpack.c.b16 %v424, %v422
    %v513 = vpack.c.b16 %v425, %v423
    %v514 = vpack.c.b16 %v428, %v426
    %v515 = vpack.c.b16 %v429, %v427
    %v516 = vpack.c.b16 %v432, %v430
    %v517 = vpack.c.b16 %v433, %v431
    %v518 = vpack.c.b16 %v436, %v434
    %v519 = vpack.c.b16 %v437, %v435
    %v520 = vpack.c.b16 %v440, %v438
    %v521 = vpack.c.b16 %v441, %v439
    %v522 = vpack.c.b16 %v444, %v442
    %v523 = vpack.c.b16 %v445, %v443
    %v524 = vpack.c.b16 %v448, %v446
    %v525 = vpack.c.b16 %v449, %v447
    %v526 = vpack.c.b16 %v452, %v450
    %v527 = vpack.c.b16 %v453, %v451
    %v528 = vpack.c.b16 %v456, %v454
    %v529 = vpack.c.b16 %v457, %v455
    %v530 = vpack.c.b16 %v460, %v458
    %v531 = vpack.c.b16 %v461, %v459
    %v532 = vpack.c.b16 %v464, %v462
    %v533 = vpack.c.b16 %v465, %v463
    %v534 = vpack.c.b16 %v468, %v466
    %v535 = vpack.c.b16 %v469, %v467
    %v536 = vpack.c.b16 %v472, %v470
    %v537 = vpack.c.b16 %v473, %v471
    %602 = vmatprep.subr.bf16.mxu0 %v489
    %603 = vmatpush1.bf16.msra.mxu0 %v488
    %604 = vmatprep.subr.bf16.mxu0 %v487
    %605 = vmatpush1.bf16.msra.mxu0 %v486
    %606 = vmatprep.subr.bf16.mxu0 %v485
    %607 = vmatpush1.bf16.msra.mxu0 %v484
    %608 = vmatprep.subr.bf16.mxu0 %v483
    %609 = vmatpush1.bf16.msra.mxu0 %v482
    %610 = vmatprep.subr.bf16.mxu0 %v481
    %611 = vmatpush1.bf16.msra.mxu0 %v480
    %612 = vmatprep.subr.bf16.mxu0 %v479
    %613 = vmatpush1.bf16.msra.mxu0 %v478
    %614 = vmatprep.subr.bf16.mxu0 %v477
    %615 = vmatpush1.bf16.msra.mxu0 %v476
    %616 = vmatprep.subr.bf16.mxu0 %v475
    %617 = vmatpush1.bf16.msra.mxu0 %v474
    %618 = vmatprep.subr.bf16.mxu0 %v505
    %619 = vmatpush2.bf16.msra.mxu0 %v504
    %620 = vmatprep.subr.bf16.mxu0 %v503
    %621 = vmatpush2.bf16.msra.mxu0 %v502
    %622 = vmatprep.subr.bf16.mxu0 %v501
    %623 = vmatpush2.bf16.msra.mxu0 %v500
    %624 = vmatprep.subr.bf16.mxu0 %v499
    %625 = vmatpush2.bf16.msra.mxu0 %v498
    %626 = vmatprep.subr.bf16.mxu0 %v497
    %627 = vmatpush2.bf16.msra.mxu0 %v496
    %628 = vmatprep.subr.bf16.mxu0 %v495
    %629 = vmatpush2.bf16.msra.mxu0 %v494
    %630 = vmatprep.subr.bf16.mxu0 %v493
    %631 = vmatpush2.bf16.msra.mxu0 %v492
    %632 = vmatprep.subr.bf16.mxu0 %v491
    %633 = vmatpush2.bf16.msra.mxu0 %v490
    %634 = vmatprep.mubr.bf16.mxu0 %v275
    %635 = vmatmul.mubr.bf16.gmra.mxu0 %v274
    %v636 = vpop.f32.mrf.mxu0
    %v637 = vadd.f32 0.0, %v636
    %v638 = vpop.f32.mrf.mxu0
    %v639 = vadd.f32 0.0, %v638
    %v640 = vpop.f32.mrf.mxu0
    %v641 = vadd.f32 0.0, %v640
    %v642 = vpop.f32.mrf.mxu0
    %v643 = vadd.f32 0.0, %v642
    %644 = vdwg.mxu0
    %645 = vmatprep.subr.bf16.mxu0 %v521
    %646 = vmatpush1.bf16.msra.mxu0 %v520
    %647 = vmatprep.subr.bf16.mxu0 %v519
    %648 = vmatpush1.bf16.msra.mxu0 %v518
    %649 = vmatprep.subr.bf16.mxu0 %v517
    %650 = vmatpush1.bf16.msra.mxu0 %v516
    %651 = vmatprep.subr.bf16.mxu0 %v515
    %652 = vmatpush1.bf16.msra.mxu0 %v514
    %653 = vmatprep.subr.bf16.mxu0 %v513
    %654 = vmatpush1.bf16.msra.mxu0 %v512
    %655 = vmatprep.subr.bf16.mxu0 %v511
    %656 = vmatpush1.bf16.msra.mxu0 %v510
    %657 = vmatprep.subr.bf16.mxu0 %v509
    %658 = vmatpush1.bf16.msra.mxu0 %v508
    %659 = vmatprep.subr.bf16.mxu0 %v507
    %660 = vmatpush1.bf16.msra.mxu0 %v506
    %661 = vmatprep.subr.bf16.mxu0 %v537
    %662 = vmatpush2.bf16.msra.mxu0 %v536
    %663 = vmatprep.subr.bf16.mxu0 %v535
    %664 = vmatpush2.bf16.msra.mxu0 %v534
    %665 = vmatprep.subr.bf16.mxu0 %v533
    %666 = vmatpush2.bf16.msra.mxu0 %v532
    %667 = vmatprep.subr.bf16.mxu0 %v531
    %668 = vmatpush2.bf16.msra.mxu0 %v530
    %669 = vmatprep.subr.bf16.mxu0 %v529
    %670 = vmatpush2.bf16.msra.mxu0 %v528
    %671 = vmatprep.subr.bf16.mxu0 %v527
    %672 = vmatpush2.bf16.msra.mxu0 %v526
    %673 = vmatprep.subr.bf16.mxu0 %v525
    %674 = vmatpush2.bf16.msra.mxu0 %v524
    %675 = vmatprep.subr.bf16.mxu0 %v523
    %676 = vmatpush2.bf16.msra.mxu0 %v522
    %677 = vmatprep.mubr.bf16.mxu0 %v277
    %678 = vmatmul.mubr.bf16.gmra.mxu0 %v276
    %v679 = vpop.f32.mrf.mxu0
    %v680 = vadd.f32 %v637, %v679
    %v681 = vpop.f32.mrf.mxu0
    %v682 = vadd.f32 %v639, %v681
    %v683 = vpop.f32.mrf.mxu0
    %v684 = vadd.f32 %v641, %v683
    %v685 = vpop.f32.mrf.mxu0
    %v686 = vadd.f32 %v643, %v685
    %687 = vdwg.mxu0
    %v692 = vunpack.c.l.b16 %v126
    %v693 = vunpack.c.h.b16 %v126
    %v694 = vunpack.c.l.b16 %v127
    %v695 = vunpack.c.h.b16 %v127
    %v696 = vunpack.c.l.b16 %v128
    %v697 = vunpack.c.h.b16 %v128
    %v698 = vunpack.c.l.b16 %v129
    %v699 = vunpack.c.h.b16 %v129
    %v700 = vpack.c.b16 %v696, %v692
    %v701 = vpack.c.b16 %v697, %v693
    %v702 = vpack.c.b16 %v698, %v694
    %v703 = vpack.c.b16 %v699, %v695
    %v772 = vunpack.c.l.b16 %v130
    %v773 = vunpack.c.h.b16 %v130
    %v774 = vunpack.c.l.b16 %v131
    %v775 = vunpack.c.h.b16 %v131
    %v776 = vunpack.c.l.b16 %v132
    %v777 = vunpack.c.h.b16 %v132
    %v778 = vunpack.c.l.b16 %v133
    %v779 = vunpack.c.h.b16 %v133
    %v780 = vunpack.c.l.b16 %v134
    %v781 = vunpack.c.h.b16 %v134
    %v782 = vunpack.c.l.b16 %v135
    %v783 = vunpack.c.h.b16 %v135
    %v784 = vunpack.c.l.b16 %v136
    %v785 = vunpack.c.h.b16 %v136
    %v786 = vunpack.c.l.b16 %v137
    %v787 = vunpack.c.h.b16 %v137
    %v788 = vunpack.c.l.b16 %v138
    %v789 = vunpack.c.h.b16 %v138
    %v790 = vunpack.c.l.b16 %v139
    %v791 = vunpack.c.h.b16 %v139
    %v792 = vunpack.c.l.b16 %v140
    %v793 = vunpack.c.h.b16 %v140
    %v794 = vunpack.c.l.b16 %v141
    %v795 = vunpack.c.h.b16 %v141
    %v796 = vunpack.c.l.b16 %v142
    %v797 = vunpack.c.h.b16 %v142
    %v798 = vunpack.c.l.b16 %v143
    %v799 = vunpack.c.h.b16 %v143
    %v800 = vunpack.c.l.b16 %v144
    %v801 = vunpack.c.h.b16 %v144
    %v802 = vunpack.c.l.b16 %v145
    %v803 = vunpack.c.h.b16 %v145
    %v804 = vunpack.c.l.b16 %v146
    %v805 = vunpack.c.h.b16 %v146
    %v806 = vunpack.c.l.b16 %v147
    %v807 = vunpack.c.h.b16 %v147
    %v808 = vunpack.c.l.b16 %v148
    %v809 = vunpack.c.h.b16 %v148
    %v810 = vunpack.c.l.b16 %v149
    %v811 = vunpack.c.h.b16 %v149
    %v812 = vunpack.c.l.b16 %v150
    %v813 = vunpack.c.h.b16 %v150
    %v814 = vunpack.c.l.b16 %v151
    %v815 = vunpack.c.h.b16 %v151
    %v816 = vunpack.c.l.b16 %v152
    %v817 = vunpack.c.h.b16 %v152
    %v818 = vunpack.c.l.b16 %v153
    %v819 = vunpack.c.h.b16 %v153
    %v820 = vunpack.c.l.b16 %v154
    %v821 = vunpack.c.h.b16 %v154
    %v822 = vunpack.c.l.b16 %v155
    %v823 = vunpack.c.h.b16 %v155
    %v824 = vunpack.c.l.b16 %v156
    %v825 = vunpack.c.h.b16 %v156
    %v826 = vunpack.c.l.b16 %v157
    %v827 = vunpack.c.h.b16 %v157
    %v828 = vunpack.c.l.b16 %v158
    %v829 = vunpack.c.h.b16 %v158
    %v830 = vunpack.c.l.b16 %v159
    %v831 = vunpack.c.h.b16 %v159
    %v832 = vunpack.c.l.b16 %v160
    %v833 = vunpack.c.h.b16 %v160
    %v834 = vunpack.c.l.b16 %v161
    %v835 = vunpack.c.h.b16 %v161
    %v836 = vunpack.c.l.b16 %v162
    %v837 = vunpack.c.h.b16 %v162
    %v838 = vunpack.c.l.b16 %v163
    %v839 = vunpack.c.h.b16 %v163
    %v840 = vunpack.c.l.b16 %v164
    %v841 = vunpack.c.h.b16 %v164
    %v842 = vunpack.c.l.b16 %v165
    %v843 = vunpack.c.h.b16 %v165
    %v844 = vunpack.c.l.b16 %v166
    %v845 = vunpack.c.h.b16 %v166
    %v846 = vunpack.c.l.b16 %v167
    %v847 = vunpack.c.h.b16 %v167
    %v848 = vunpack.c.l.b16 %v168
    %v849 = vunpack.c.h.b16 %v168
    %v850 = vunpack.c.l.b16 %v169
    %v851 = vunpack.c.h.b16 %v169
    %v852 = vunpack.c.l.b16 %v170
    %v853 = vunpack.c.h.b16 %v170
    %v854 = vunpack.c.l.b16 %v171
    %v855 = vunpack.c.h.b16 %v171
    %v856 = vunpack.c.l.b16 %v172
    %v857 = vunpack.c.h.b16 %v172
    %v858 = vunpack.c.l.b16 %v173
    %v859 = vunpack.c.h.b16 %v173
    %v860 = vunpack.c.l.b16 %v174
    %v861 = vunpack.c.h.b16 %v174
    %v862 = vunpack.c.l.b16 %v175
    %v863 = vunpack.c.h.b16 %v175
    %v864 = vunpack.c.l.b16 %v176
    %v865 = vunpack.c.h.b16 %v176
    %v866 = vunpack.c.l.b16 %v177
    %v867 = vunpack.c.h.b16 %v177
    %v868 = vunpack.c.l.b16 %v178
    %v869 = vunpack.c.h.b16 %v178
    %v870 = vunpack.c.l.b16 %v179
    %v871 = vunpack.c.h.b16 %v179
    %v872 = vunpack.c.l.b16 %v180
    %v873 = vunpack.c.h.b16 %v180
    %v874 = vunpack.c.l.b16 %v181
    %v875 = vunpack.c.h.b16 %v181
    %v876 = vunpack.c.l.b16 %v182
    %v877 = vunpack.c.h.b16 %v182
    %v878 = vunpack.c.l.b16 %v183
    %v879 = vunpack.c.h.b16 %v183
    %v880 = vunpack.c.l.b16 %v184
    %v881 = vunpack.c.h.b16 %v184
    %v882 = vunpack.c.l.b16 %v185
    %v883 = vunpack.c.h.b16 %v185
    %v884 = vunpack.c.l.b16 %v186
    %v885 = vunpack.c.h.b16 %v186
    %v886 = vunpack.c.l.b16 %v187
    %v887 = vunpack.c.h.b16 %v187
    %v888 = vunpack.c.l.b16 %v188
    %v889 = vunpack.c.h.b16 %v188
    %v890 = vunpack.c.l.b16 %v189
    %v891 = vunpack.c.h.b16 %v189
    %v892 = vunpack.c.l.b16 %v190
    %v893 = vunpack.c.h.b16 %v190
    %v894 = vunpack.c.l.b16 %v191
    %v895 = vunpack.c.h.b16 %v191
    %v896 = vunpack.c.l.b16 %v192
    %v897 = vunpack.c.h.b16 %v192
    %v898 = vunpack.c.l.b16 %v193
    %v899 = vunpack.c.h.b16 %v193
    %v900 = vpack.c.b16 %v774, %v772
    %v901 = vpack.c.b16 %v775, %v773
    %v902 = vpack.c.b16 %v778, %v776
    %v903 = vpack.c.b16 %v779, %v777
    %v904 = vpack.c.b16 %v782, %v780
    %v905 = vpack.c.b16 %v783, %v781
    %v906 = vpack.c.b16 %v786, %v784
    %v907 = vpack.c.b16 %v787, %v785
    %v908 = vpack.c.b16 %v790, %v788
    %v909 = vpack.c.b16 %v791, %v789
    %v910 = vpack.c.b16 %v794, %v792
    %v911 = vpack.c.b16 %v795, %v793
    %v912 = vpack.c.b16 %v798, %v796
    %v913 = vpack.c.b16 %v799, %v797
    %v914 = vpack.c.b16 %v802, %v800
    %v915 = vpack.c.b16 %v803, %v801
    %v916 = vpack.c.b16 %v806, %v804
    %v917 = vpack.c.b16 %v807, %v805
    %v918 = vpack.c.b16 %v810, %v808
    %v919 = vpack.c.b16 %v811, %v809
    %v920 = vpack.c.b16 %v814, %v812
    %v921 = vpack.c.b16 %v815, %v813
    %v922 = vpack.c.b16 %v818, %v816
    %v923 = vpack.c.b16 %v819, %v817
    %v924 = vpack.c.b16 %v822, %v820
    %v925 = vpack.c.b16 %v823, %v821
    %v926 = vpack.c.b16 %v826, %v824
    %v927 = vpack.c.b16 %v827, %v825
    %v928 = vpack.c.b16 %v830, %v828
    %v929 = vpack.c.b16 %v831, %v829
    %v930 = vpack.c.b16 %v834, %v832
    %v931 = vpack.c.b16 %v835, %v833
    %v932 = vpack.c.b16 %v838, %v836
    %v933 = vpack.c.b16 %v839, %v837
    %v934 = vpack.c.b16 %v842, %v840
    %v935 = vpack.c.b16 %v843, %v841
    %v936 = vpack.c.b16 %v846, %v844
    %v937 = vpack.c.b16 %v847, %v845
    %v938 = vpack.c.b16 %v850, %v848
    %v939 = vpack.c.b16 %v851, %v849
    %v940 = vpack.c.b16 %v854, %v852
    %v941 = vpack.c.b16 %v855, %v853
    %v942 = vpack.c.b16 %v858, %v856
    %v943 = vpack.c.b16 %v859, %v857
    %v944 = vpack.c.b16 %v862, %v860
    %v945 = vpack.c.b16 %v863, %v861
    %v946 = vpack.c.b16 %v866, %v864
    %v947 = vpack.c.b16 %v867, %v865
    %v948 = vpack.c.b16 %v870, %v868
    %v949 = vpack.c.b16 %v871, %v869
    %v950 = vpack.c.b16 %v874, %v872
    %v951 = vpack.c.b16 %v875, %v873
    %v952 = vpack.c.b16 %v878, %v876
    %v953 = vpack.c.b16 %v879, %v877
    %v954 = vpack.c.b16 %v882, %v880
    %v955 = vpack.c.b16 %v883, %v881
    %v956 = vpack.c.b16 %v886, %v884
    %v957 = vpack.c.b16 %v887, %v885
    %v958 = vpack.c.b16 %v890, %v888
    %v959 = vpack.c.b16 %v891, %v889
    %v960 = vpack.c.b16 %v894, %v892
    %v961 = vpack.c.b16 %v895, %v893
    %v962 = vpack.c.b16 %v898, %v896
    %v963 = vpack.c.b16 %v899, %v897
    %1028 = vmatprep.subr.bf16.mxu0 %v915
    %1029 = vmatpush1.bf16.msra.mxu0 %v914
    %1030 = vmatprep.subr.bf16.mxu0 %v913
    %1031 = vmatpush1.bf16.msra.mxu0 %v912
    %1032 = vmatprep.subr.bf16.mxu0 %v911
    %1033 = vmatpush1.bf16.msra.mxu0 %v910
    %1034 = vmatprep.subr.bf16.mxu0 %v909
    %1035 = vmatpush1.bf16.msra.mxu0 %v908
    %1036 = vmatprep.subr.bf16.mxu0 %v907
    %1037 = vmatpush1.bf16.msra.mxu0 %v906
    %1038 = vmatprep.subr.bf16.mxu0 %v905
    %1039 = vmatpush1.bf16.msra.mxu0 %v904
    %1040 = vmatprep.subr.bf16.mxu0 %v903
    %1041 = vmatpush1.bf16.msra.mxu0 %v902
    %1042 = vmatprep.subr.bf16.mxu0 %v901
    %1043 = vmatpush1.bf16.msra.mxu0 %v900
    %1044 = vmatprep.subr.bf16.mxu0 %v931
    %1045 = vmatpush2.bf16.msra.mxu0 %v930
    %1046 = vmatprep.subr.bf16.mxu0 %v929
    %1047 = vmatpush2.bf16.msra.mxu0 %v928
    %1048 = vmatprep.subr.bf16.mxu0 %v927
    %1049 = vmatpush2.bf16.msra.mxu0 %v926
    %1050 = vmatprep.subr.bf16.mxu0 %v925
    %1051 = vmatpush2.bf16.msra.mxu0 %v924
    %1052 = vmatprep.subr.bf16.mxu0 %v923
    %1053 = vmatpush2.bf16.msra.mxu0 %v922
    %1054 = vmatprep.subr.bf16.mxu0 %v921
    %1055 = vmatpush2.bf16.msra.mxu0 %v920
    %1056 = vmatprep.subr.bf16.mxu0 %v919
    %1057 = vmatpush2.bf16.msra.mxu0 %v918
    %1058 = vmatprep.subr.bf16.mxu0 %v917
    %1059 = vmatpush2.bf16.msra.mxu0 %v916
    %1060 = vmatprep.mubr.bf16.mxu0 %v701
    %1061 = vmatmul.mubr.bf16.gmra.mxu0 %v700
    %v1062 = vpop.f32.mrf.mxu0
    %v1063 = vadd.f32 %v680, %v1062
    %v1064 = vpop.f32.mrf.mxu0
    %v1065 = vadd.f32 %v682, %v1064
    %v1066 = vpop.f32.mrf.mxu0
    %v1067 = vadd.f32 %v684, %v1066
    %v1068 = vpop.f32.mrf.mxu0
    %v1069 = vadd.f32 %v686, %v1068
    %1070 = vdwg.mxu0
    %1071 = vmatprep.subr.bf16.mxu0 %v947
    %1072 = vmatpush1.bf16.msra.mxu0 %v946
    %1073 = vmatprep.subr.bf16.mxu0 %v945
    %1074 = vmatpush1.bf16.msra.mxu0 %v944
    %1075 = vmatprep.subr.bf16.mxu0 %v943
    %1076 = vmatpush1.bf16.msra.mxu0 %v942
    %1077 = vmatprep.subr.bf16.mxu0 %v941
    %1078 = vmatpush1.bf16.msra.mxu0 %v940
    %1079 = vmatprep.subr.bf16.mxu0 %v939
    %1080 = vmatpush1.bf16.msra.mxu0 %v938
    %1081 = vmatprep.subr.bf16.mxu0 %v937
    %1082 = vmatpush1.bf16.msra.mxu0 %v936
    %1083 = vmatprep.subr.bf16.mxu0 %v935
    %1084 = vmatpush1.bf16.msra.mxu0 %v934
    %1085 = vmatprep.subr.bf16.mxu0 %v933
    %1086 = vmatpush1.bf16.msra.mxu0 %v932
    %1087 = vmatprep.subr.bf16.mxu0 %v963
    %1088 = vmatpush2.bf16.msra.mxu0 %v962
    %1089 = vmatprep.subr.bf16.mxu0 %v961
    %1090 = vmatpush2.bf16.msra.mxu0 %v960
    %1091 = vmatprep.subr.bf16.mxu0 %v959
    %1092 = vmatpush2.bf16.msra.mxu0 %v958
    %1093 = vmatprep.subr.bf16.mxu0 %v957
    %1094 = vmatpush2.bf16.msra.mxu0 %v956
    %1095 = vmatprep.subr.bf16.mxu0 %v955
    %1096 = vmatpush2.bf16.msra.mxu0 %v954
    %1097 = vmatprep.subr.bf16.mxu0 %v953
    %1098 = vmatpush2.bf16.msra.mxu0 %v952
    %1099 = vmatprep.subr.bf16.mxu0 %v951
    %1100 = vmatpush2.bf16.msra.mxu0 %v950
    %1101 = vmatprep.subr.bf16.mxu0 %v949
    %1102 = vmatpush2.bf16.msra.mxu0 %v948
    %1103 = vmatprep.mubr.bf16.mxu0 %v703
    %1104 = vmatmul.mubr.bf16.gmra.mxu0 %v702
    %v1105 = vpop.f32.mrf.mxu0
    %v1106 = vadd.f32 %v1063, %v1105
    %v1107 = vpop.f32.mrf.mxu0
    %v1108 = vadd.f32 %v1065, %v1107
    %v1109 = vpop.f32.mrf.mxu0
    %v1110 = vadd.f32 %v1067, %v1109
    %v1111 = vpop.f32.mrf.mxu0
    %v1112 = vadd.f32 %v1069, %v1111
    %1113 = vdwg.mxu0
    %v1114 = vld [vmem:[#allocation10] sm:$0x3]
    %v1116 = vlaneseq
    %v1117 = vshrl.u32 %v1116, 7
    %v1118 = vsub.s32 0, %v1117
    %v1119 = vrot.slane %v1114, %v1118
    %v1120 = vlaneseq
    %v1121 = vshrl.u32 %v1120, 7
    %v1122 = vsub.s32 1, %v1121
    %v1123 = vrot.slane %v1114, %v1122
    %v1126 = vadd.f32 %v1106, %v1119
    %v1127 = vadd.f32 %v1108, %v1123
    %v1128 = vadd.f32 %v1110, %v1119
    %v1129 = vadd.f32 %v1112, %v1123
    %v1130 = vmax.f32 %v1126, 0.0
    %v1131 = vmax.f32 %v1127, 0.0
    %v1132 = vmax.f32 %v1128, 0.0
    %v1133 = vmax.f32 %v1129, 0.0
    %v1134 = vpack.c.bf16 %v1132, %v1130
    %v1135 = vpack.c.bf16 %v1133, %v1131
    %v1136 = vld [vmem:[#allocation11] sm:$0xff]
    %v1137 = vld [vmem:[#allocation11 + $0x8] sm:$0xff]
    %v1138 = vld [vmem:[#allocation11 + $0x10] sm:$0xff]
    %v1139 = vld [vmem:[#allocation11 + $0x18] sm:$0xff]
    %v1140 = vld [vmem:[#allocation11 + $0x20] sm:$0xff]
    %v1141 = vld [vmem:[#allocation11 + $0x28] sm:$0xff]
    %v1142 = vld [vmem:[#allocation11 + $0x30] sm:$0xff]
    %v1143 = vld [vmem:[#allocation11 + $0x38] sm:$0xff]
    %v1144 = vld [vmem:[#allocation11 + $0x40] sm:$0xff]
    %v1145 = vld [vmem:[#allocation11 + $0x48] sm:$0xff]
    %v1146 = vld [vmem:[#allocation11 + $0x50] sm:$0xff]
    %v1147 = vld [vmem:[#allocation11 + $0x58] sm:$0xff]
    %v1148 = vld [vmem:[#allocation11 + $0x60] sm:$0xff]
    %v1149 = vld [vmem:[#allocation11 + $0x68] sm:$0xff]
    %v1150 = vld [vmem:[#allocation11 + $0x70] sm:$0xff]
    %v1151 = vld [vmem:[#allocation11 + $0x78] sm:$0xff]
    %v1152 = vld [vmem:[#allocation11 + $0x80] sm:$0xff]
    %v1153 = vld [vmem:[#allocation11 + $0x88] sm:$0xff]
    %v1154 = vld [vmem:[#allocation11 + $0x90] sm:$0xff]
    %v1155 = vld [vmem:[#allocation11 + $0x98] sm:$0xff]
    %v1156 = vld [vmem:[#allocation11 + $0xa0] sm:$0xff]
    %v1157 = vld [vmem:[#allocation11 + $0xa8] sm:$0xff]
    %v1158 = vld [vmem:[#allocation11 + $0xb0] sm:$0xff]
    %v1159 = vld [vmem:[#allocation11 + $0xb8] sm:$0xff]
    %v1160 = vld [vmem:[#allocation11 + $0xc0] sm:$0xff]
    %v1161 = vld [vmem:[#allocation11 + $0xc8] sm:$0xff]
    %v1162 = vld [vmem:[#allocation11 + $0xd0] sm:$0xff]
    %v1163 = vld [vmem:[#allocation11 + $0xd8] sm:$0xff]
    %v1164 = vld [vmem:[#allocation11 + $0xe0] sm:$0xff]
    %v1165 = vld [vmem:[#allocation11 + $0xe8] sm:$0xff]
    %v1166 = vld [vmem:[#allocation11 + $0xf0] sm:$0xff]
    %v1167 = vld [vmem:[#allocation11 + $0xf8] sm:$0xff]
    %v1168 = vld [vmem:[#allocation11 + $0x100] sm:$0xff]
    %v1169 = vld [vmem:[#allocation11 + $0x108] sm:$0xff]
    %v1170 = vld [vmem:[#allocation11 + $0x110] sm:$0xff]
    %v1171 = vld [vmem:[#allocation11 + $0x118] sm:$0xff]
    %v1172 = vld [vmem:[#allocation11 + $0x120] sm:$0xff]
    %v1173 = vld [vmem:[#allocation11 + $0x128] sm:$0xff]
    %v1174 = vld [vmem:[#allocation11 + $0x130] sm:$0xff]
    %v1175 = vld [vmem:[#allocation11 + $0x138] sm:$0xff]
    %v1176 = vld [vmem:[#allocation11 + $0x140] sm:$0xff]
    %v1177 = vld [vmem:[#allocation11 + $0x148] sm:$0xff]
    %v1178 = vld [vmem:[#allocation11 + $0x150] sm:$0xff]
    %v1179 = vld [vmem:[#allocation11 + $0x158] sm:$0xff]
    %v1180 = vld [vmem:[#allocation11 + $0x160] sm:$0xff]
    %v1181 = vld [vmem:[#allocation11 + $0x168] sm:$0xff]
    %v1182 = vld [vmem:[#allocation11 + $0x170] sm:$0xff]
    %v1183 = vld [vmem:[#allocation11 + $0x178] sm:$0xff]
    %v1184 = vld [vmem:[#allocation11 + $0x180] sm:$0xff]
    %v1185 = vld [vmem:[#allocation11 + $0x188] sm:$0xff]
    %v1186 = vld [vmem:[#allocation11 + $0x190] sm:$0xff]
    %v1187 = vld [vmem:[#allocation11 + $0x198] sm:$0xff]
    %v1188 = vld [vmem:[#allocation11 + $0x1a0] sm:$0xff]
    %v1189 = vld [vmem:[#allocation11 + $0x1a8] sm:$0xff]
    %v1190 = vld [vmem:[#allocation11 + $0x1b0] sm:$0xff]
    %v1191 = vld [vmem:[#allocation11 + $0x1b8] sm:$0xff]
    %v1192 = vld [vmem:[#allocation11 + $0x1c0] sm:$0xff]
    %v1193 = vld [vmem:[#allocation11 + $0x1c8] sm:$0xff]
    %v1194 = vld [vmem:[#allocation11 + $0x1d0] sm:$0xff]
    %v1195 = vld [vmem:[#allocation11 + $0x1d8] sm:$0xff]
    %v1196 = vld [vmem:[#allocation11 + $0x1e0] sm:$0xff]
    %v1197 = vld [vmem:[#allocation11 + $0x1e8] sm:$0xff]
    %v1198 = vld [vmem:[#allocation11 + $0x1f0] sm:$0xff]
    %v1199 = vld [vmem:[#allocation11 + $0x1f8] sm:$0xff]
    %v1200 = vld [vmem:[%s6] sm:$0xf]
    %v1202 = vlaneseq
    %v1203 = vshrl.u32 %v1202, 7
    %v1204 = vsub.s32 0, %v1203
    %v1205 = vrot.slane %v1200, %v1204
    %v1206 = vlaneseq
    %v1207 = vshrl.u32 %v1206, 7
    %v1208 = vsub.s32 1, %v1207
    %v1209 = vrot.slane %v1200, %v1208
    %v1210 = vlaneseq
    %v1211 = vshrl.u32 %v1210, 7
    %v1212 = vsub.s32 2, %v1211
    %v1213 = vrot.slane %v1200, %v1212
    %v1214 = vlaneseq
    %v1215 = vshrl.u32 %v1214, 7
    %v1216 = vsub.s32 3, %v1215
    %v1217 = vrot.slane %v1200, %v1216
    %v1286 = vunpack.c.l.b16 %v1136
    %v1287 = vunpack.c.h.b16 %v1136
    %v1288 = vunpack.c.l.b16 %v1137
    %v1289 = vunpack.c.h.b16 %v1137
    %v1290 = vunpack.c.l.b16 %v1138
    %v1291 = vunpack.c.h.b16 %v1138
    %v1292 = vunpack.c.l.b16 %v1139
    %v1293 = vunpack.c.h.b16 %v1139
    %v1294 = vunpack.c.l.b16 %v1140
    %v1295 = vunpack.c.h.b16 %v1140
    %v1296 = vunpack.c.l.b16 %v1141
    %v1297 = vunpack.c.h.b16 %v1141
    %v1298 = vunpack.c.l.b16 %v1142
    %v1299 = vunpack.c.h.b16 %v1142
    %v1300 = vunpack.c.l.b16 %v1143
    %v1301 = vunpack.c.h.b16 %v1143
    %v1302 = vunpack.c.l.b16 %v1144
    %v1303 = vunpack.c.h.b16 %v1144
    %v1304 = vunpack.c.l.b16 %v1145
    %v1305 = vunpack.c.h.b16 %v1145
    %v1306 = vunpack.c.l.b16 %v1146
    %v1307 = vunpack.c.h.b16 %v1146
    %v1308 = vunpack.c.l.b16 %v1147
    %v1309 = vunpack.c.h.b16 %v1147
    %v1310 = vunpack.c.l.b16 %v1148
    %v1311 = vunpack.c.h.b16 %v1148
    %v1312 = vunpack.c.l.b16 %v1149
    %v1313 = vunpack.c.h.b16 %v1149
    %v1314 = vunpack.c.l.b16 %v1150
    %v1315 = vunpack.c.h.b16 %v1150
    %v1316 = vunpack.c.l.b16 %v1151
    %v1317 = vunpack.c.h.b16 %v1151
    %v1318 = vunpack.c.l.b16 %v1152
    %v1319 = vunpack.c.h.b16 %v1152
    %v1320 = vunpack.c.l.b16 %v1153
    %v1321 = vunpack.c.h.b16 %v1153
    %v1322 = vunpack.c.l.b16 %v1154
    %v1323 = vunpack.c.h.b16 %v1154
    %v1324 = vunpack.c.l.b16 %v1155
    %v1325 = vunpack.c.h.b16 %v1155
    %v1326 = vunpack.c.l.b16 %v1156
    %v1327 = vunpack.c.h.b16 %v1156
    %v1328 = vunpack.c.l.b16 %v1157
    %v1329 = vunpack.c.h.b16 %v1157
    %v1330 = vunpack.c.l.b16 %v1158
    %v1331 = vunpack.c.h.b16 %v1158
    %v1332 = vunpack.c.l.b16 %v1159
    %v1333 = vunpack.c.h.b16 %v1159
    %v1334 = vunpack.c.l.b16 %v1160
    %v1335 = vunpack.c.h.b16 %v1160
    %v1336 = vunpack.c.l.b16 %v1161
    %v1337 = vunpack.c.h.b16 %v1161
    %v1338 = vunpack.c.l.b16 %v1162
    %v1339 = vunpack.c.h.b16 %v1162
    %v1340 = vunpack.c.l.b16 %v1163
    %v1341 = vunpack.c.h.b16 %v1163
    %v1342 = vunpack.c.l.b16 %v1164
    %v1343 = vunpack.c.h.b16 %v1164
    %v1344 = vunpack.c.l.b16 %v1165
    %v1345 = vunpack.c.h.b16 %v1165
    %v1346 = vunpack.c.l.b16 %v1166
    %v1347 = vunpack.c.h.b16 %v1166
    %v1348 = vunpack.c.l.b16 %v1167
    %v1349 = vunpack.c.h.b16 %v1167
    %v1350 = vunpack.c.l.b16 %v1168
    %v1351 = vunpack.c.h.b16 %v1168
    %v1352 = vunpack.c.l.b16 %v1169
    %v1353 = vunpack.c.h.b16 %v1169
    %v1354 = vunpack.c.l.b16 %v1170
    %v1355 = vunpack.c.h.b16 %v1170
    %v1356 = vunpack.c.l.b16 %v1171
    %v1357 = vunpack.c.h.b16 %v1171
    %v1358 = vunpack.c.l.b16 %v1172
    %v1359 = vunpack.c.h.b16 %v1172
    %v1360 = vunpack.c.l.b16 %v1173
    %v1361 = vunpack.c.h.b16 %v1173
    %v1362 = vunpack.c.l.b16 %v1174
    %v1363 = vunpack.c.h.b16 %v1174
    %v1364 = vunpack.c.l.b16 %v1175
    %v1365 = vunpack.c.h.b16 %v1175
    %v1366 = vunpack.c.l.b16 %v1176
    %v1367 = vunpack.c.h.b16 %v1176
    %v1368 = vunpack.c.l.b16 %v1177
    %v1369 = vunpack.c.h.b16 %v1177
    %v1370 = vunpack.c.l.b16 %v1178
    %v1371 = vunpack.c.h.b16 %v1178
    %v1372 = vunpack.c.l.b16 %v1179
    %v1373 = vunpack.c.h.b16 %v1179
    %v1374 = vunpack.c.l.b16 %v1180
    %v1375 = vunpack.c.h.b16 %v1180
    %v1376 = vunpack.c.l.b16 %v1181
    %v1377 = vunpack.c.h.b16 %v1181
    %v1378 = vunpack.c.l.b16 %v1182
    %v1379 = vunpack.c.h.b16 %v1182
    %v1380 = vunpack.c.l.b16 %v1183
    %v1381 = vunpack.c.h.b16 %v1183
    %v1382 = vunpack.c.l.b16 %v1184
    %v1383 = vunpack.c.h.b16 %v1184
    %v1384 = vunpack.c.l.b16 %v1185
    %v1385 = vunpack.c.h.b16 %v1185
    %v1386 = vunpack.c.l.b16 %v1186
    %v1387 = vunpack.c.h.b16 %v1186
    %v1388 = vunpack.c.l.b16 %v1187
    %v1389 = vunpack.c.h.b16 %v1187
    %v1390 = vunpack.c.l.b16 %v1188
    %v1391 = vunpack.c.h.b16 %v1188
    %v1392 = vunpack.c.l.b16 %v1189
    %v1393 = vunpack.c.h.b16 %v1189
    %v1394 = vunpack.c.l.b16 %v1190
    %v1395 = vunpack.c.h.b16 %v1190
    %v1396 = vunpack.c.l.b16 %v1191
    %v1397 = vunpack.c.h.b16 %v1191
    %v1398 = vunpack.c.l.b16 %v1192
    %v1399 = vunpack.c.h.b16 %v1192
    %v1400 = vunpack.c.l.b16 %v1193
    %v1401 = vunpack.c.h.b16 %v1193
    %v1402 = vunpack.c.l.b16 %v1194
    %v1403 = vunpack.c.h.b16 %v1194
    %v1404 = vunpack.c.l.b16 %v1195
    %v1405 = vunpack.c.h.b16 %v1195
    %v1406 = vunpack.c.l.b16 %v1196
    %v1407 = vunpack.c.h.b16 %v1196
    %v1408 = vunpack.c.l.b16 %v1197
    %v1409 = vunpack.c.h.b16 %v1197
    %v1410 = vunpack.c.l.b16 %v1198
    %v1411 = vunpack.c.h.b16 %v1198
    %v1412 = vunpack.c.l.b16 %v1199
    %v1413 = vunpack.c.h.b16 %v1199
    %v1414 = vpack.c.b16 %v1290, %v1286
    %v1415 = vpack.c.b16 %v1291, %v1287
    %v1416 = vpack.c.b16 %v1292, %v1288
    %v1417 = vpack.c.b16 %v1293, %v1289
    %v1418 = vpack.c.b16 %v1298, %v1294
    %v1419 = vpack.c.b16 %v1299, %v1295
    %v1420 = vpack.c.b16 %v1300, %v1296
    %v1421 = vpack.c.b16 %v1301, %v1297
    %v1422 = vpack.c.b16 %v1306, %v1302
    %v1423 = vpack.c.b16 %v1307, %v1303
    %v1424 = vpack.c.b16 %v1308, %v1304
    %v1425 = vpack.c.b16 %v1309, %v1305
    %v1426 = vpack.c.b16 %v1314, %v1310
    %v1427 = vpack.c.b16 %v1315, %v1311
    %v1428 = vpack.c.b16 %v1316, %v1312
    %v1429 = vpack.c.b16 %v1317, %v1313
    %v1430 = vpack.c.b16 %v1322, %v1318
    %v1431 = vpack.c.b16 %v1323, %v1319
    %v1432 = vpack.c.b16 %v1324, %v1320
    %v1433 = vpack.c.b16 %v1325, %v1321
    %v1434 = vpack.c.b16 %v1330, %v1326
    %v1435 = vpack.c.b16 %v1331, %v1327
    %v1436 = vpack.c.b16 %v1332, %v1328
    %v1437 = vpack.c.b16 %v1333, %v1329
    %v1438 = vpack.c.b16 %v1338, %v1334
    %v1439 = vpack.c.b16 %v1339, %v1335
    %v1440 = vpack.c.b16 %v1340, %v1336
    %v1441 = vpack.c.b16 %v1341, %v1337
    %v1442 = vpack.c.b16 %v1346, %v1342
    %v1443 = vpack.c.b16 %v1347, %v1343
    %v1444 = vpack.c.b16 %v1348, %v1344
    %v1445 = vpack.c.b16 %v1349, %v1345
    %v1446 = vpack.c.b16 %v1354, %v1350
    %v1447 = vpack.c.b16 %v1355, %v1351
    %v1448 = vpack.c.b16 %v1356, %v1352
    %v1449 = vpack.c.b16 %v1357, %v1353
    %v1450 = vpack.c.b16 %v1362, %v1358
    %v1451 = vpack.c.b16 %v1363, %v1359
    %v1452 = vpack.c.b16 %v1364, %v1360
    %v1453 = vpack.c.b16 %v1365, %v1361
    %v1454 = vpack.c.b16 %v1370, %v1366
    %v1455 = vpack.c.b16 %v1371, %v1367
    %v1456 = vpack.c.b16 %v1372, %v1368
    %v1457 = vpack.c.b16 %v1373, %v1369
    %v1458 = vpack.c.b16 %v1378, %v1374
    %v1459 = vpack.c.b16 %v1379, %v1375
    %v1460 = vpack.c.b16 %v1380, %v1376
    %v1461 = vpack.c.b16 %v1381, %v1377
    %v1462 = vpack.c.b16 %v1386, %v1382
    %v1463 = vpack.c.b16 %v1387, %v1383
    %v1464 = vpack.c.b16 %v1388, %v1384
    %v1465 = vpack.c.b16 %v1389, %v1385
    %v1466 = vpack.c.b16 %v1394, %v1390
    %v1467 = vpack.c.b16 %v1395, %v1391
    %v1468 = vpack.c.b16 %v1396, %v1392
    %v1469 = vpack.c.b16 %v1397, %v1393
    %v1470 = vpack.c.b16 %v1402, %v1398
    %v1471 = vpack.c.b16 %v1403, %v1399
    %v1472 = vpack.c.b16 %v1404, %v1400
    %v1473 = vpack.c.b16 %v1405, %v1401
    %v1474 = vpack.c.b16 %v1410, %v1406
    %v1475 = vpack.c.b16 %v1411, %v1407
    %v1476 = vpack.c.b16 %v1412, %v1408
    %v1477 = vpack.c.b16 %v1413, %v1409
    %1542 = vmatprep.subr.bf16.mxu0 %v1443
    %1543 = vmatpush1.bf16.msra.mxu0 %v1442
    %1544 = vmatprep.subr.bf16.mxu0 %v1439
    %1545 = vmatpush1.bf16.msra.mxu0 %v1438
    %1546 = vmatprep.subr.bf16.mxu0 %v1435
    %1547 = vmatpush1.bf16.msra.mxu0 %v1434
    %1548 = vmatprep.subr.bf16.mxu0 %v1431
    %1549 = vmatpush1.bf16.msra.mxu0 %v1430
    %1550 = vmatprep.subr.bf16.mxu0 %v1427
    %1551 = vmatpush1.bf16.msra.mxu0 %v1426
    %1552 = vmatprep.subr.bf16.mxu0 %v1423
    %1553 = vmatpush1.bf16.msra.mxu0 %v1422
    %1554 = vmatprep.subr.bf16.mxu0 %v1419
    %1555 = vmatpush1.bf16.msra.mxu0 %v1418
    %1556 = vmatprep.subr.bf16.mxu0 %v1415
    %1557 = vmatpush1.bf16.msra.mxu0 %v1414
    %1558 = vmatprep.subr.bf16.mxu0 %v1475
    %1559 = vmatpush2.bf16.msra.mxu0 %v1474
    %1560 = vmatprep.subr.bf16.mxu0 %v1471
    %1561 = vmatpush2.bf16.msra.mxu0 %v1470
    %1562 = vmatprep.subr.bf16.mxu0 %v1467
    %1563 = vmatpush2.bf16.msra.mxu0 %v1466
    %1564 = vmatprep.subr.bf16.mxu0 %v1463
    %1565 = vmatpush2.bf16.msra.mxu0 %v1462
    %1566 = vmatprep.subr.bf16.mxu0 %v1459
    %1567 = vmatpush2.bf16.msra.mxu0 %v1458
    %1568 = vmatprep.subr.bf16.mxu0 %v1455
    %1569 = vmatpush2.bf16.msra.mxu0 %v1454
    %1570 = vmatprep.subr.bf16.mxu0 %v1451
    %1571 = vmatpush2.bf16.msra.mxu0 %v1450
    %1572 = vmatprep.subr.bf16.mxu0 %v1447
    %1573 = vmatpush2.bf16.msra.mxu0 %v1446
    %1574 = vmatprep.mubr.bf16.mxu0 %v1135
    %1575 = vmatmul.mubr.bf16.gmra.mxu0 %v1134
    %v1576 = vpop.f32.mrf.mxu0
    %v1577 = vadd.f32 %v1205, %v1576
    %v1578 = vpop.f32.mrf.mxu0
    %v1579 = vadd.f32 %v1209, %v1578
    %v1580 = vpop.f32.mrf.mxu0
    %v1581 = vadd.f32 %v1205, %v1580
    %v1582 = vpop.f32.mrf.mxu0
    %v1583 = vadd.f32 %v1209, %v1582
    %1584 = vdwg.mxu0
    %1585 = vmatprep.subr.bf16.mxu0 %v1445
    %1586 = vmatpush1.bf16.msra.mxu0 %v1444
    %1587 = vmatprep.subr.bf16.mxu0 %v1441
    %1588 = vmatpush1.bf16.msra.mxu0 %v1440
    %1589 = vmatprep.subr.bf16.mxu0 %v1437
    %1590 = vmatpush1.bf16.msra.mxu0 %v1436
    %1591 = vmatprep.subr.bf16.mxu0 %v1433
    %1592 = vmatpush1.bf16.msra.mxu0 %v1432
    %1593 = vmatprep.subr.bf16.mxu0 %v1429
    %1594 = vmatpush1.bf16.msra.mxu0 %v1428
    %1595 = vmatprep.subr.bf16.mxu0 %v1425
    %1596 = vmatpush1.bf16.msra.mxu0 %v1424
    %1597 = vmatprep.subr.bf16.mxu0 %v1421
    %1598 = vmatpush1.bf16.msra.mxu0 %v1420
    %1599 = vmatprep.subr.bf16.mxu0 %v1417
    %1600 = vmatpush1.bf16.msra.mxu0 %v1416
    %1601 = vmatprep.subr.bf16.mxu0 %v1477
    %1602 = vmatpush2.bf16.msra.mxu0 %v1476
    %1603 = vmatprep.subr.bf16.mxu0 %v1473
    %1604 = vmatpush2.bf16.msra.mxu0 %v1472
    %1605 = vmatprep.subr.bf16.mxu0 %v1469
    %1606 = vmatpush2.bf16.msra.mxu0 %v1468
    %1607 = vmatprep.subr.bf16.mxu0 %v1465
    %1608 = vmatpush2.bf16.msra.mxu0 %v1464
    %1609 = vmatprep.subr.bf16.mxu0 %v1461
    %1610 = vmatpush2.bf16.msra.mxu0 %v1460
    %1611 = vmatprep.subr.bf16.mxu0 %v1457
    %1612 = vmatpush2.bf16.msra.mxu0 %v1456
    %1613 = vmatprep.subr.bf16.mxu0 %v1453
    %1614 = vmatpush2.bf16.msra.mxu0 %v1452
    %1615 = vmatprep.subr.bf16.mxu0 %v1449
    %1616 = vmatpush2.bf16.msra.mxu0 %v1448
    %1617 = vmatprep.mubr.bf16.mxu0 %v1135
    %1618 = vmatmul.mubr.bf16.gmra.mxu0 %v1134
    %v1619 = vpop.f32.mrf.mxu0
    %v1620 = vadd.f32 %v1213, %v1619
    %v1621 = vpop.f32.mrf.mxu0
    %v1622 = vadd.f32 %v1217, %v1621
    %v1623 = vpop.f32.mrf.mxu0
    %v1624 = vadd.f32 %v1213, %v1623
    %v1625 = vpop.f32.mrf.mxu0
    %v1626 = vadd.f32 %v1217, %v1625
    %1627 = vdwg.mxu0
    %v1628 = vmax.f32 %v1577, 0.0
    %v1629 = vmax.f32 %v1579, 0.0
    %v1630 = vmax.f32 %v1620, 0.0
    %v1631 = vmax.f32 %v1622, 0.0
    %v1632 = vmax.f32 %v1581, 0.0
    %v1633 = vmax.f32 %v1583, 0.0
    %v1634 = vmax.f32 %v1624, 0.0
    %v1635 = vmax.f32 %v1626, 0.0
    %v1636 = vpack.c.bf16 %v1632, %v1628
    %v1637 = vpack.c.bf16 %v1633, %v1629
    %v1638 = vpack.c.bf16 %v1634, %v1630
    %v1639 = vpack.c.bf16 %v1635, %v1631
    %v1640 = vld [vmem:[#allocation13] sm:$0xff]
    %v1641 = vld [vmem:[#allocation13 + $0x8] sm:$0xff]
    %v1642 = vld [vmem:[#allocation13 + $0x10] sm:$0xff]
    %v1643 = vld [vmem:[#allocation13 + $0x18] sm:$0xff]
    %v1644 = vld [vmem:[#allocation13 + $0x20] sm:$0xff]
    %v1645 = vld [vmem:[#allocation13 + $0x28] sm:$0xff]
    %v1646 = vld [vmem:[#allocation13 + $0x30] sm:$0xff]
    %v1647 = vld [vmem:[#allocation13 + $0x38] sm:$0xff]
    %v1648 = vld [vmem:[#allocation13 + $0x40] sm:$0xff]
    %v1649 = vld [vmem:[#allocation13 + $0x48] sm:$0xff]
    %v1650 = vld [vmem:[#allocation13 + $0x50] sm:$0xff]
    %v1651 = vld [vmem:[#allocation13 + $0x58] sm:$0xff]
    %v1652 = vld [vmem:[#allocation13 + $0x60] sm:$0xff]
    %v1653 = vld [vmem:[#allocation13 + $0x68] sm:$0xff]
    %v1654 = vld [vmem:[#allocation13 + $0x70] sm:$0xff]
    %v1655 = vld [vmem:[#allocation13 + $0x78] sm:$0xff]
    %v1656 = vld [vmem:[#allocation13 + $0x80] sm:$0xff]
    %v1657 = vld [vmem:[#allocation13 + $0x88] sm:$0xff]
    %v1658 = vld [vmem:[#allocation13 + $0x90] sm:$0xff]
    %v1659 = vld [vmem:[#allocation13 + $0x98] sm:$0xff]
    %v1660 = vld [vmem:[#allocation13 + $0xa0] sm:$0xff]
    %v1661 = vld [vmem:[#allocation13 + $0xa8] sm:$0xff]
    %v1662 = vld [vmem:[#allocation13 + $0xb0] sm:$0xff]
    %v1663 = vld [vmem:[#allocation13 + $0xb8] sm:$0xff]
    %v1664 = vld [vmem:[#allocation13 + $0xc0] sm:$0xff]
    %v1665 = vld [vmem:[#allocation13 + $0xc8] sm:$0xff]
    %v1666 = vld [vmem:[#allocation13 + $0xd0] sm:$0xff]
    %v1667 = vld [vmem:[#allocation13 + $0xd8] sm:$0xff]
    %v1668 = vld [vmem:[#allocation13 + $0xe0] sm:$0xff]
    %v1669 = vld [vmem:[#allocation13 + $0xe8] sm:$0xff]
    %v1670 = vld [vmem:[#allocation13 + $0xf0] sm:$0xff]
    %v1671 = vld [vmem:[#allocation13 + $0xf8] sm:$0xff]
    %v1672 = vld [vmem:[#allocation13 + $0x100] sm:$0xff]
    %v1673 = vld [vmem:[#allocation13 + $0x108] sm:$0xff]
    %v1674 = vld [vmem:[#allocation13 + $0x110] sm:$0xff]
    %v1675 = vld [vmem:[#allocation13 + $0x118] sm:$0xff]
    %v1676 = vld [vmem:[#allocation13 + $0x120] sm:$0xff]
    %v1677 = vld [vmem:[#allocation13 + $0x128] sm:$0xff]
    %v1678 = vld [vmem:[#allocation13 + $0x130] sm:$0xff]
    %v1679 = vld [vmem:[#allocation13 + $0x138] sm:$0xff]
    %v1680 = vld [vmem:[#allocation13 + $0x140] sm:$0xff]
    %v1681 = vld [vmem:[#allocation13 + $0x148] sm:$0xff]
    %v1682 = vld [vmem:[#allocation13 + $0x150] sm:$0xff]
    %v1683 = vld [vmem:[#allocation13 + $0x158] sm:$0xff]
    %v1684 = vld [vmem:[#allocation13 + $0x160] sm:$0xff]
    %v1685 = vld [vmem:[#allocation13 + $0x168] sm:$0xff]
    %v1686 = vld [vmem:[#allocation13 + $0x170] sm:$0xff]
    %v1687 = vld [vmem:[#allocation13 + $0x178] sm:$0xff]
    %v1688 = vld [vmem:[#allocation13 + $0x180] sm:$0xff]
    %v1689 = vld [vmem:[#allocation13 + $0x188] sm:$0xff]
    %v1690 = vld [vmem:[#allocation13 + $0x190] sm:$0xff]
    %v1691 = vld [vmem:[#allocation13 + $0x198] sm:$0xff]
    %v1692 = vld [vmem:[#allocation13 + $0x1a0] sm:$0xff]
    %v1693 = vld [vmem:[#allocation13 + $0x1a8] sm:$0xff]
    %v1694 = vld [vmem:[#allocation13 + $0x1b0] sm:$0xff]
    %v1695 = vld [vmem:[#allocation13 + $0x1b8] sm:$0xff]
    %v1696 = vld [vmem:[#allocation13 + $0x1c0] sm:$0xff]
    %v1697 = vld [vmem:[#allocation13 + $0x1c8] sm:$0xff]
    %v1698 = vld [vmem:[#allocation13 + $0x1d0] sm:$0xff]
    %v1699 = vld [vmem:[#allocation13 + $0x1d8] sm:$0xff]
    %v1700 = vld [vmem:[#allocation13 + $0x1e0] sm:$0xff]
    %v1701 = vld [vmem:[#allocation13 + $0x1e8] sm:$0xff]
    %v1702 = vld [vmem:[#allocation13 + $0x1f0] sm:$0xff]
    %v1703 = vld [vmem:[#allocation13 + $0x1f8] sm:$0xff]
    %v1704 = vld [vmem:[#allocation13 + $0x200] sm:$0xff]
    %v1705 = vld [vmem:[#allocation13 + $0x208] sm:$0xff]
    %v1706 = vld [vmem:[#allocation13 + $0x210] sm:$0xff]
    %v1707 = vld [vmem:[#allocation13 + $0x218] sm:$0xff]
    %v1708 = vld [vmem:[#allocation13 + $0x220] sm:$0xff]
    %v1709 = vld [vmem:[#allocation13 + $0x228] sm:$0xff]
    %v1710 = vld [vmem:[#allocation13 + $0x230] sm:$0xff]
    %v1711 = vld [vmem:[#allocation13 + $0x238] sm:$0xff]
    %v1712 = vld [vmem:[#allocation13 + $0x240] sm:$0xff]
    %v1713 = vld [vmem:[#allocation13 + $0x248] sm:$0xff]
    %v1714 = vld [vmem:[#allocation13 + $0x250] sm:$0xff]
    %v1715 = vld [vmem:[#allocation13 + $0x258] sm:$0xff]
    %v1716 = vld [vmem:[#allocation13 + $0x260] sm:$0xff]
    %v1717 = vld [vmem:[#allocation13 + $0x268] sm:$0xff]
    %v1718 = vld [vmem:[#allocation13 + $0x270] sm:$0xff]
    %v1719 = vld [vmem:[#allocation13 + $0x278] sm:$0xff]
    %v1720 = vld [vmem:[#allocation13 + $0x280] sm:$0xff]
    %v1721 = vld [vmem:[#allocation13 + $0x288] sm:$0xff]
    %v1722 = vld [vmem:[#allocation13 + $0x290] sm:$0xff]
    %v1723 = vld [vmem:[#allocation13 + $0x298] sm:$0xff]
    %v1724 = vld [vmem:[#allocation13 + $0x2a0] sm:$0xff]
    %v1725 = vld [vmem:[#allocation13 + $0x2a8] sm:$0xff]
    %v1726 = vld [vmem:[#allocation13 + $0x2b0] sm:$0xff]
    %v1727 = vld [vmem:[#allocation13 + $0x2b8] sm:$0xff]
    %v1728 = vld [vmem:[#allocation13 + $0x2c0] sm:$0xff]
    %v1729 = vld [vmem:[#allocation13 + $0x2c8] sm:$0xff]
    %v1730 = vld [vmem:[#allocation13 + $0x2d0] sm:$0xff]
    %v1731 = vld [vmem:[#allocation13 + $0x2d8] sm:$0xff]
    %v1732 = vld [vmem:[#allocation13 + $0x2e0] sm:$0xff]
    %v1733 = vld [vmem:[#allocation13 + $0x2e8] sm:$0xff]
    %v1734 = vld [vmem:[#allocation13 + $0x2f0] sm:$0xff]
    %v1735 = vld [vmem:[#allocation13 + $0x2f8] sm:$0xff]
    %v1736 = vld [vmem:[#allocation13 + $0x300] sm:$0xff]
    %v1737 = vld [vmem:[#allocation13 + $0x308] sm:$0xff]
    %v1738 = vld [vmem:[#allocation13 + $0x310] sm:$0xff]
    %v1739 = vld [vmem:[#allocation13 + $0x318] sm:$0xff]
    %v1740 = vld [vmem:[#allocation13 + $0x320] sm:$0xff]
    %v1741 = vld [vmem:[#allocation13 + $0x328] sm:$0xff]
    %v1742 = vld [vmem:[#allocation13 + $0x330] sm:$0xff]
    %v1743 = vld [vmem:[#allocation13 + $0x338] sm:$0xff]
    %v1744 = vld [vmem:[#allocation13 + $0x340] sm:$0xff]
    %v1745 = vld [vmem:[#allocation13 + $0x348] sm:$0xff]
    %v1746 = vld [vmem:[#allocation13 + $0x350] sm:$0xff]
    %v1747 = vld [vmem:[#allocation13 + $0x358] sm:$0xff]
    %v1748 = vld [vmem:[#allocation13 + $0x360] sm:$0xff]
    %v1749 = vld [vmem:[#allocation13 + $0x368] sm:$0xff]
    %v1750 = vld [vmem:[#allocation13 + $0x370] sm:$0xff]
    %v1751 = vld [vmem:[#allocation13 + $0x378] sm:$0xff]
    %v1752 = vld [vmem:[#allocation13 + $0x380] sm:$0xff]
    %v1753 = vld [vmem:[#allocation13 + $0x388] sm:$0xff]
    %v1754 = vld [vmem:[#allocation13 + $0x390] sm:$0xff]
    %v1755 = vld [vmem:[#allocation13 + $0x398] sm:$0xff]
    %v1756 = vld [vmem:[#allocation13 + $0x3a0] sm:$0xff]
    %v1757 = vld [vmem:[#allocation13 + $0x3a8] sm:$0xff]
    %v1758 = vld [vmem:[#allocation13 + $0x3b0] sm:$0xff]
    %v1759 = vld [vmem:[#allocation13 + $0x3b8] sm:$0xff]
    %v1760 = vld [vmem:[#allocation13 + $0x3c0] sm:$0xff]
    %v1761 = vld [vmem:[#allocation13 + $0x3c8] sm:$0xff]
    %v1762 = vld [vmem:[#allocation13 + $0x3d0] sm:$0xff]
    %v1763 = vld [vmem:[#allocation13 + $0x3d8] sm:$0xff]
    %v1764 = vld [vmem:[#allocation13 + $0x3e0] sm:$0xff]
    %v1765 = vld [vmem:[#allocation13 + $0x3e8] sm:$0xff]
    %v1766 = vld [vmem:[#allocation13 + $0x3f0] sm:$0xff]
    %v1767 = vld [vmem:[#allocation13 + $0x3f8] sm:$0xff]
    %v1768 = vld [vmem:[%s8] sm:$0xf]
    %v1770 = vlaneseq
    %v1771 = vshrl.u32 %v1770, 7
    %v1772 = vsub.s32 0, %v1771
    %v1773 = vrot.slane %v1768, %v1772
    %v1774 = vlaneseq
    %v1775 = vshrl.u32 %v1774, 7
    %v1776 = vsub.s32 1, %v1775
    %v1777 = vrot.slane %v1768, %v1776
    %v1778 = vlaneseq
    %v1779 = vshrl.u32 %v1778, 7
    %v1780 = vsub.s32 2, %v1779
    %v1781 = vrot.slane %v1768, %v1780
    %v1782 = vlaneseq
    %v1783 = vshrl.u32 %v1782, 7
    %v1784 = vsub.s32 3, %v1783
    %v1785 = vrot.slane %v1768, %v1784
    %v1918 = vunpack.c.l.b16 %v1640
    %v1919 = vunpack.c.h.b16 %v1640
    %v1920 = vunpack.c.l.b16 %v1641
    %v1921 = vunpack.c.h.b16 %v1641
    %v1922 = vunpack.c.l.b16 %v1642
    %v1923 = vunpack.c.h.b16 %v1642
    %v1924 = vunpack.c.l.b16 %v1643
    %v1925 = vunpack.c.h.b16 %v1643
    %v1926 = vunpack.c.l.b16 %v1644
    %v1927 = vunpack.c.h.b16 %v1644
    %v1928 = vunpack.c.l.b16 %v1645
    %v1929 = vunpack.c.h.b16 %v1645
    %v1930 = vunpack.c.l.b16 %v1646
    %v1931 = vunpack.c.h.b16 %v1646
    %v1932 = vunpack.c.l.b16 %v1647
    %v1933 = vunpack.c.h.b16 %v1647
    %v1934 = vunpack.c.l.b16 %v1648
    %v1935 = vunpack.c.h.b16 %v1648
    %v1936 = vunpack.c.l.b16 %v1649
    %v1937 = vunpack.c.h.b16 %v1649
    %v1938 = vunpack.c.l.b16 %v1650
    %v1939 = vunpack.c.h.b16 %v1650
    %v1940 = vunpack.c.l.b16 %v1651
    %v1941 = vunpack.c.h.b16 %v1651
    %v1942 = vunpack.c.l.b16 %v1652
    %v1943 = vunpack.c.h.b16 %v1652
    %v1944 = vunpack.c.l.b16 %v1653
    %v1945 = vunpack.c.h.b16 %v1653
    %v1946 = vunpack.c.l.b16 %v1654
    %v1947 = vunpack.c.h.b16 %v1654
    %v1948 = vunpack.c.l.b16 %v1655
    %v1949 = vunpack.c.h.b16 %v1655
    %v1950 = vunpack.c.l.b16 %v1656
    %v1951 = vunpack.c.h.b16 %v1656
    %v1952 = vunpack.c.l.b16 %v1657
    %v1953 = vunpack.c.h.b16 %v1657
    %v1954 = vunpack.c.l.b16 %v1658
    %v1955 = vunpack.c.h.b16 %v1658
    %v1956 = vunpack.c.l.b16 %v1659
    %v1957 = vunpack.c.h.b16 %v1659
    %v1958 = vunpack.c.l.b16 %v1660
    %v1959 = vunpack.c.h.b16 %v1660
    %v1960 = vunpack.c.l.b16 %v1661
    %v1961 = vunpack.c.h.b16 %v1661
    %v1962 = vunpack.c.l.b16 %v1662
    %v1963 = vunpack.c.h.b16 %v1662
    %v1964 = vunpack.c.l.b16 %v1663
    %v1965 = vunpack.c.h.b16 %v1663
    %v1966 = vunpack.c.l.b16 %v1664
    %v1967 = vunpack.c.h.b16 %v1664
    %v1968 = vunpack.c.l.b16 %v1665
    %v1969 = vunpack.c.h.b16 %v1665
    %v1970 = vunpack.c.l.b16 %v1666
    %v1971 = vunpack.c.h.b16 %v1666
    %v1972 = vunpack.c.l.b16 %v1667
    %v1973 = vunpack.c.h.b16 %v1667
    %v1974 = vunpack.c.l.b16 %v1668
    %v1975 = vunpack.c.h.b16 %v1668
    %v1976 = vunpack.c.l.b16 %v1669
    %v1977 = vunpack.c.h.b16 %v1669
    %v1978 = vunpack.c.l.b16 %v1670
    %v1979 = vunpack.c.h.b16 %v1670
    %v1980 = vunpack.c.l.b16 %v1671
    %v1981 = vunpack.c.h.b16 %v1671
    %v1982 = vunpack.c.l.b16 %v1672
    %v1983 = vunpack.c.h.b16 %v1672
    %v1984 = vunpack.c.l.b16 %v1673
    %v1985 = vunpack.c.h.b16 %v1673
    %v1986 = vunpack.c.l.b16 %v1674
    %v1987 = vunpack.c.h.b16 %v1674
    %v1988 = vunpack.c.l.b16 %v1675
    %v1989 = vunpack.c.h.b16 %v1675
    %v1990 = vunpack.c.l.b16 %v1676
    %v1991 = vunpack.c.h.b16 %v1676
    %v1992 = vunpack.c.l.b16 %v1677
    %v1993 = vunpack.c.h.b16 %v1677
    %v1994 = vunpack.c.l.b16 %v1678
    %v1995 = vunpack.c.h.b16 %v1678
    %v1996 = vunpack.c.l.b16 %v1679
    %v1997 = vunpack.c.h.b16 %v1679
    %v1998 = vunpack.c.l.b16 %v1680
    %v1999 = vunpack.c.h.b16 %v1680
    %v2000 = vunpack.c.l.b16 %v1681
    %v2001 = vunpack.c.h.b16 %v1681
    %v2002 = vunpack.c.l.b16 %v1682
    %v2003 = vunpack.c.h.b16 %v1682
    %v2004 = vunpack.c.l.b16 %v1683
    %v2005 = vunpack.c.h.b16 %v1683
    %v2006 = vunpack.c.l.b16 %v1684
    %v2007 = vunpack.c.h.b16 %v1684
    %v2008 = vunpack.c.l.b16 %v1685
    %v2009 = vunpack.c.h.b16 %v1685
    %v2010 = vunpack.c.l.b16 %v1686
    %v2011 = vunpack.c.h.b16 %v1686
    %v2012 = vunpack.c.l.b16 %v1687
    %v2013 = vunpack.c.h.b16 %v1687
    %v2014 = vunpack.c.l.b16 %v1688
    %v2015 = vunpack.c.h.b16 %v1688
    %v2016 = vunpack.c.l.b16 %v1689
    %v2017 = vunpack.c.h.b16 %v1689
    %v2018 = vunpack.c.l.b16 %v1690
    %v2019 = vunpack.c.h.b16 %v1690
    %v2020 = vunpack.c.l.b16 %v1691
    %v2021 = vunpack.c.h.b16 %v1691
    %v2022 = vunpack.c.l.b16 %v1692
    %v2023 = vunpack.c.h.b16 %v1692
    %v2024 = vunpack.c.l.b16 %v1693
    %v2025 = vunpack.c.h.b16 %v1693
    %v2026 = vunpack.c.l.b16 %v1694
    %v2027 = vunpack.c.h.b16 %v1694
    %v2028 = vunpack.c.l.b16 %v1695
    %v2029 = vunpack.c.h.b16 %v1695
    %v2030 = vunpack.c.l.b16 %v1696
    %v2031 = vunpack.c.h.b16 %v1696
    %v2032 = vunpack.c.l.b16 %v1697
    %v2033 = vunpack.c.h.b16 %v1697
    %v2034 = vunpack.c.l.b16 %v1698
    %v2035 = vunpack.c.h.b16 %v1698
    %v2036 = vunpack.c.l.b16 %v1699
    %v2037 = vunpack.c.h.b16 %v1699
    %v2038 = vunpack.c.l.b16 %v1700
    %v2039 = vunpack.c.h.b16 %v1700
    %v2040 = vunpack.c.l.b16 %v1701
    %v2041 = vunpack.c.h.b16 %v1701
    %v2042 = vunpack.c.l.b16 %v1702
    %v2043 = vunpack.c.h.b16 %v1702
    %v2044 = vunpack.c.l.b16 %v1703
    %v2045 = vunpack.c.h.b16 %v1703
    %v2046 = vunpack.c.l.b16 %v1704
    %v2047 = vunpack.c.h.b16 %v1704
    %v2048 = vunpack.c.l.b16 %v1705
    %v2049 = vunpack.c.h.b16 %v1705
    %v2050 = vunpack.c.l.b16 %v1706
    %v2051 = vunpack.c.h.b16 %v1706
    %v2052 = vunpack.c.l.b16 %v1707
    %v2053 = vunpack.c.h.b16 %v1707
    %v2054 = vunpack.c.l.b16 %v1708
    %v2055 = vunpack.c.h.b16 %v1708
    %v2056 = vunpack.c.l.b16 %v1709
    %v2057 = vunpack.c.h.b16 %v1709
    %v2058 = vunpack.c.l.b16 %v1710
    %v2059 = vunpack.c.h.b16 %v1710
    %v2060 = vunpack.c.l.b16 %v1711
    %v2061 = vunpack.c.h.b16 %v1711
    %v2062 = vunpack.c.l.b16 %v1712
    %v2063 = vunpack.c.h.b16 %v1712
    %v2064 = vunpack.c.l.b16 %v1713
    %v2065 = vunpack.c.h.b16 %v1713
    %v2066 = vunpack.c.l.b16 %v1714
    %v2067 = vunpack.c.h.b16 %v1714
    %v2068 = vunpack.c.l.b16 %v1715
    %v2069 = vunpack.c.h.b16 %v1715
    %v2070 = vunpack.c.l.b16 %v1716
    %v2071 = vunpack.c.h.b16 %v1716
    %v2072 = vunpack.c.l.b16 %v1717
    %v2073 = vunpack.c.h.b16 %v1717
    %v2074 = vunpack.c.l.b16 %v1718
    %v2075 = vunpack.c.h.b16 %v1718
    %v2076 = vunpack.c.l.b16 %v1719
    %v2077 = vunpack.c.h.b16 %v1719
    %v2078 = vunpack.c.l.b16 %v1720
    %v2079 = vunpack.c.h.b16 %v1720
    %v2080 = vunpack.c.l.b16 %v1721
    %v2081 = vunpack.c.h.b16 %v1721
    %v2082 = vunpack.c.l.b16 %v1722
    %v2083 = vunpack.c.h.b16 %v1722
    %v2084 = vunpack.c.l.b16 %v1723
    %v2085 = vunpack.c.h.b16 %v1723
    %v2086 = vunpack.c.l.b16 %v1724
    %v2087 = vunpack.c.h.b16 %v1724
    %v2088 = vunpack.c.l.b16 %v1725
    %v2089 = vunpack.c.h.b16 %v1725
    %v2090 = vunpack.c.l.b16 %v1726
    %v2091 = vunpack.c.h.b16 %v1726
    %v2092 = vunpack.c.l.b16 %v1727
    %v2093 = vunpack.c.h.b16 %v1727
    %v2094 = vunpack.c.l.b16 %v1728
    %v2095 = vunpack.c.h.b16 %v1728
    %v2096 = vunpack.c.l.b16 %v1729
    %v2097 = vunpack.c.h.b16 %v1729
    %v2098 = vunpack.c.l.b16 %v1730
    %v2099 = vunpack.c.h.b16 %v1730
    %v2100 = vunpack.c.l.b16 %v1731
    %v2101 = vunpack.c.h.b16 %v1731
    %v2102 = vunpack.c.l.b16 %v1732
    %v2103 = vunpack.c.h.b16 %v1732
    %v2104 = vunpack.c.l.b16 %v1733
    %v2105 = vunpack.c.h.b16 %v1733
    %v2106 = vunpack.c.l.b16 %v1734
    %v2107 = vunpack.c.h.b16 %v1734
    %v2108 = vunpack.c.l.b16 %v1735
    %v2109 = vunpack.c.h.b16 %v1735
    %v2110 = vunpack.c.l.b16 %v1736
    %v2111 = vunpack.c.h.b16 %v1736
    %v2112 = vunpack.c.l.b16 %v1737
    %v2113 = vunpack.c.h.b16 %v1737
    %v2114 = vunpack.c.l.b16 %v1738
    %v2115 = vunpack.c.h.b16 %v1738
    %v2116 = vunpack.c.l.b16 %v1739
    %v2117 = vunpack.c.h.b16 %v1739
    %v2118 = vunpack.c.l.b16 %v1740
    %v2119 = vunpack.c.h.b16 %v1740
    %v2120 = vunpack.c.l.b16 %v1741
    %v2121 = vunpack.c.h.b16 %v1741
    %v2122 = vunpack.c.l.b16 %v1742
    %v2123 = vunpack.c.h.b16 %v1742
    %v2124 = vunpack.c.l.b16 %v1743
    %v2125 = vunpack.c.h.b16 %v1743
    %v2126 = vunpack.c.l.b16 %v1744
    %v2127 = vunpack.c.h.b16 %v1744
    %v2128 = vunpack.c.l.b16 %v1745
    %v2129 = vunpack.c.h.b16 %v1745
    %v2130 = vunpack.c.l.b16 %v1746
    %v2131 = vunpack.c.h.b16 %v1746
    %v2132 = vunpack.c.l.b16 %v1747
    %v2133 = vunpack.c.h.b16 %v1747
    %v2134 = vunpack.c.l.b16 %v1748
    %v2135 = vunpack.c.h.b16 %v1748
    %v2136 = vunpack.c.l.b16 %v1749
    %v2137 = vunpack.c.h.b16 %v1749
    %v2138 = vunpack.c.l.b16 %v1750
    %v2139 = vunpack.c.h.b16 %v1750
    %v2140 = vunpack.c.l.b16 %v1751
    %v2141 = vunpack.c.h.b16 %v1751
    %v2142 = vunpack.c.l.b16 %v1752
    %v2143 = vunpack.c.h.b16 %v1752
    %v2144 = vunpack.c.l.b16 %v1753
    %v2145 = vunpack.c.h.b16 %v1753
    %v2146 = vunpack.c.l.b16 %v1754
    %v2147 = vunpack.c.h.b16 %v1754
    %v2148 = vunpack.c.l.b16 %v1755
    %v2149 = vunpack.c.h.b16 %v1755
    %v2150 = vunpack.c.l.b16 %v1756
    %v2151 = vunpack.c.h.b16 %v1756
    %v2152 = vunpack.c.l.b16 %v1757
    %v2153 = vunpack.c.h.b16 %v1757
    %v2154 = vunpack.c.l.b16 %v1758
    %v2155 = vunpack.c.h.b16 %v1758
    %v2156 = vunpack.c.l.b16 %v1759
    %v2157 = vunpack.c.h.b16 %v1759
    %v2158 = vunpack.c.l.b16 %v1760
    %v2159 = vunpack.c.h.b16 %v1760
    %v2160 = vunpack.c.l.b16 %v1761
    %v2161 = vunpack.c.h.b16 %v1761
    %v2162 = vunpack.c.l.b16 %v1762
    %v2163 = vunpack.c.h.b16 %v1762
    %v2164 = vunpack.c.l.b16 %v1763
    %v2165 = vunpack.c.h.b16 %v1763
    %v2166 = vunpack.c.l.b16 %v1764
    %v2167 = vunpack.c.h.b16 %v1764
    %v2168 = vunpack.c.l.b16 %v1765
    %v2169 = vunpack.c.h.b16 %v1765
    %v2170 = vunpack.c.l.b16 %v1766
    %v2171 = vunpack.c.h.b16 %v1766
    %v2172 = vunpack.c.l.b16 %v1767
    %v2173 = vunpack.c.h.b16 %v1767
    %v2174 = vpack.c.b16 %v1922, %v1918
    %v2175 = vpack.c.b16 %v1923, %v1919
    %v2176 = vpack.c.b16 %v1924, %v1920
    %v2177 = vpack.c.b16 %v1925, %v1921
    %v2178 = vpack.c.b16 %v1930, %v1926
    %v2179 = vpack.c.b16 %v1931, %v1927
    %v2180 = vpack.c.b16 %v1932, %v1928
    %v2181 = vpack.c.b16 %v1933, %v1929
    %v2182 = vpack.c.b16 %v1938, %v1934
    %v2183 = vpack.c.b16 %v1939, %v1935
    %v2184 = vpack.c.b16 %v1940, %v1936
    %v2185 = vpack.c.b16 %v1941, %v1937
    %v2186 = vpack.c.b16 %v1946, %v1942
    %v2187 = vpack.c.b16 %v1947, %v1943
    %v2188 = vpack.c.b16 %v1948, %v1944
    %v2189 = vpack.c.b16 %v1949, %v1945
    %v2190 = vpack.c.b16 %v1954, %v1950
    %v2191 = vpack.c.b16 %v1955, %v1951
    %v2192 = vpack.c.b16 %v1956, %v1952
    %v2193 = vpack.c.b16 %v1957, %v1953
    %v2194 = vpack.c.b16 %v1962, %v1958
    %v2195 = vpack.c.b16 %v1963, %v1959
    %v2196 = vpack.c.b16 %v1964, %v1960
    %v2197 = vpack.c.b16 %v1965, %v1961
    %v2198 = vpack.c.b16 %v1970, %v1966
    %v2199 = vpack.c.b16 %v1971, %v1967
    %v2200 = vpack.c.b16 %v1972, %v1968
    %v2201 = vpack.c.b16 %v1973, %v1969
    %v2202 = vpack.c.b16 %v1978, %v1974
    %v2203 = vpack.c.b16 %v1979, %v1975
    %v2204 = vpack.c.b16 %v1980, %v1976
    %v2205 = vpack.c.b16 %v1981, %v1977
    %v2206 = vpack.c.b16 %v1986, %v1982
    %v2207 = vpack.c.b16 %v1987, %v1983
    %v2208 = vpack.c.b16 %v1988, %v1984
    %v2209 = vpack.c.b16 %v1989, %v1985
    %v2210 = vpack.c.b16 %v1994, %v1990
    %v2211 = vpack.c.b16 %v1995, %v1991
    %v2212 = vpack.c.b16 %v1996, %v1992
    %v2213 = vpack.c.b16 %v1997, %v1993
    %v2214 = vpack.c.b16 %v2002, %v1998
    %v2215 = vpack.c.b16 %v2003, %v1999
    %v2216 = vpack.c.b16 %v2004, %v2000
    %v2217 = vpack.c.b16 %v2005, %v2001
    %v2218 = vpack.c.b16 %v2010, %v2006
    %v2219 = vpack.c.b16 %v2011, %v2007
    %v2220 = vpack.c.b16 %v2012, %v2008
    %v2221 = vpack.c.b16 %v2013, %v2009
    %v2222 = vpack.c.b16 %v2018, %v2014
    %v2223 = vpack.c.b16 %v2019, %v2015
    %v2224 = vpack.c.b16 %v2020, %v2016
    %v2225 = vpack.c.b16 %v2021, %v2017
    %v2226 = vpack.c.b16 %v2026, %v2022
    %v2227 = vpack.c.b16 %v2027, %v2023
    %v2228 = vpack.c.b16 %v2028, %v2024
    %v2229 = vpack.c.b16 %v2029, %v2025
    %v2230 = vpack.c.b16 %v2034, %v2030
    %v2231 = vpack.c.b16 %v2035, %v2031
    %v2232 = vpack.c.b16 %v2036, %v2032
    %v2233 = vpack.c.b16 %v2037, %v2033
    %v2234 = vpack.c.b16 %v2042, %v2038
    %v2235 = vpack.c.b16 %v2043, %v2039
    %v2236 = vpack.c.b16 %v2044, %v2040
    %v2237 = vpack.c.b16 %v2045, %v2041
    %v2238 = vpack.c.b16 %v2050, %v2046
    %v2239 = vpack.c.b16 %v2051, %v2047
    %v2240 = vpack.c.b16 %v2052, %v2048
    %v2241 = vpack.c.b16 %v2053, %v2049
    %v2242 = vpack.c.b16 %v2058, %v2054
    %v2243 = vpack.c.b16 %v2059, %v2055
    %v2244 = vpack.c.b16 %v2060, %v2056
    %v2245 = vpack.c.b16 %v2061, %v2057
    %v2246 = vpack.c.b16 %v2066, %v2062
    %v2247 = vpack.c.b16 %v2067, %v2063
    %v2248 = vpack.c.b16 %v2068, %v2064
    %v2249 = vpack.c.b16 %v2069, %v2065
    %v2250 = vpack.c.b16 %v2074, %v2070
    %v2251 = vpack.c.b16 %v2075, %v2071
    %v2252 = vpack.c.b16 %v2076, %v2072
    %v2253 = vpack.c.b16 %v2077, %v2073
    %v2254 = vpack.c.b16 %v2082, %v2078
    %v2255 = vpack.c.b16 %v2083, %v2079
    %v2256 = vpack.c.b16 %v2084, %v2080
    %v2257 = vpack.c.b16 %v2085, %v2081
    %v2258 = vpack.c.b16 %v2090, %v2086
    %v2259 = vpack.c.b16 %v2091, %v2087
    %v2260 = vpack.c.b16 %v2092, %v2088
    %v2261 = vpack.c.b16 %v2093, %v2089
    %v2262 = vpack.c.b16 %v2098, %v2094
    %v2263 = vpack.c.b16 %v2099, %v2095
    %v2264 = vpack.c.b16 %v2100, %v2096
    %v2265 = vpack.c.b16 %v2101, %v2097
    %v2266 = vpack.c.b16 %v2106, %v2102
    %v2267 = vpack.c.b16 %v2107, %v2103
    %v2268 = vpack.c.b16 %v2108, %v2104
    %v2269 = vpack.c.b16 %v2109, %v2105
    %v2270 = vpack.c.b16 %v2114, %v2110
    %v2271 = vpack.c.b16 %v2115, %v2111
    %v2272 = vpack.c.b16 %v2116, %v2112
    %v2273 = vpack.c.b16 %v2117, %v2113
    %v2274 = vpack.c.b16 %v2122, %v2118
    %v2275 = vpack.c.b16 %v2123, %v2119
    %v2276 = vpack.c.b16 %v2124, %v2120
    %v2277 = vpack.c.b16 %v2125, %v2121
    %v2278 = vpack.c.b16 %v2130, %v2126
    %v2279 = vpack.c.b16 %v2131, %v2127
    %v2280 = vpack.c.b16 %v2132, %v2128
    %v2281 = vpack.c.b16 %v2133, %v2129
    %v2282 = vpack.c.b16 %v2138, %v2134
    %v2283 = vpack.c.b16 %v2139, %v2135
    %v2284 = vpack.c.b16 %v2140, %v2136
    %v2285 = vpack.c.b16 %v2141, %v2137
    %v2286 = vpack.c.b16 %v2146, %v2142
    %v2287 = vpack.c.b16 %v2147, %v2143
    %v2288 = vpack.c.b16 %v2148, %v2144
    %v2289 = vpack.c.b16 %v2149, %v2145
    %v2290 = vpack.c.b16 %v2154, %v2150
    %v2291 = vpack.c.b16 %v2155, %v2151
    %v2292 = vpack.c.b16 %v2156, %v2152
    %v2293 = vpack.c.b16 %v2157, %v2153
    %v2294 = vpack.c.b16 %v2162, %v2158
    %v2295 = vpack.c.b16 %v2163, %v2159
    %v2296 = vpack.c.b16 %v2164, %v2160
    %v2297 = vpack.c.b16 %v2165, %v2161
    %v2298 = vpack.c.b16 %v2170, %v2166
    %v2299 = vpack.c.b16 %v2171, %v2167
    %v2300 = vpack.c.b16 %v2172, %v2168
    %v2301 = vpack.c.b16 %v2173, %v2169
    %2430 = vmatprep.subr.bf16.mxu0 %v2203
    %2431 = vmatpush1.bf16.msra.mxu0 %v2202
    %2432 = vmatprep.subr.bf16.mxu0 %v2199
    %2433 = vmatpush1.bf16.msra.mxu0 %v2198
    %2434 = vmatprep.subr.bf16.mxu0 %v2195
    %2435 = vmatpush1.bf16.msra.mxu0 %v2194
    %2436 = vmatprep.subr.bf16.mxu0 %v2191
    %2437 = vmatpush1.bf16.msra.mxu0 %v2190
    %2438 = vmatprep.subr.bf16.mxu0 %v2187
    %2439 = vmatpush1.bf16.msra.mxu0 %v2186
    %2440 = vmatprep.subr.bf16.mxu0 %v2183
    %2441 = vmatpush1.bf16.msra.mxu0 %v2182
    %2442 = vmatprep.subr.bf16.mxu0 %v2179
    %2443 = vmatpush1.bf16.msra.mxu0 %v2178
    %2444 = vmatprep.subr.bf16.mxu0 %v2175
    %2445 = vmatpush1.bf16.msra.mxu0 %v2174
    %2446 = vmatprep.subr.bf16.mxu0 %v2235
    %2447 = vmatpush2.bf16.msra.mxu0 %v2234
    %2448 = vmatprep.subr.bf16.mxu0 %v2231
    %2449 = vmatpush2.bf16.msra.mxu0 %v2230
    %2450 = vmatprep.subr.bf16.mxu0 %v2227
    %2451 = vmatpush2.bf16.msra.mxu0 %v2226
    %2452 = vmatprep.subr.bf16.mxu0 %v2223
    %2453 = vmatpush2.bf16.msra.mxu0 %v2222
    %2454 = vmatprep.subr.bf16.mxu0 %v2219
    %2455 = vmatpush2.bf16.msra.mxu0 %v2218
    %2456 = vmatprep.subr.bf16.mxu0 %v2215
    %2457 = vmatpush2.bf16.msra.mxu0 %v2214
    %2458 = vmatprep.subr.bf16.mxu0 %v2211
    %2459 = vmatpush2.bf16.msra.mxu0 %v2210
    %2460 = vmatprep.subr.bf16.mxu0 %v2207
    %2461 = vmatpush2.bf16.msra.mxu0 %v2206
    %2462 = vmatprep.mubr.bf16.mxu0 %v1637
    %2463 = vmatmul.mubr.bf16.gmra.mxu0 %v1636
    %v2464 = vpop.f32.mrf.mxu0
    %v2465 = vadd.f32 %v1773, %v2464
    %v2466 = vpop.f32.mrf.mxu0
    %v2467 = vadd.f32 %v1777, %v2466
    %v2468 = vpop.f32.mrf.mxu0
    %v2469 = vadd.f32 %v1773, %v2468
    %v2470 = vpop.f32.mrf.mxu0
    %v2471 = vadd.f32 %v1777, %v2470
    %2472 = vdwg.mxu0
    %2473 = vmatprep.subr.bf16.mxu0 %v2267
    %2474 = vmatpush1.bf16.msra.mxu0 %v2266
    %2475 = vmatprep.subr.bf16.mxu0 %v2263
    %2476 = vmatpush1.bf16.msra.mxu0 %v2262
    %2477 = vmatprep.subr.bf16.mxu0 %v2259
    %2478 = vmatpush1.bf16.msra.mxu0 %v2258
    %2479 = vmatprep.subr.bf16.mxu0 %v2255
    %2480 = vmatpush1.bf16.msra.mxu0 %v2254
    %2481 = vmatprep.subr.bf16.mxu0 %v2251
    %2482 = vmatpush1.bf16.msra.mxu0 %v2250
    %2483 = vmatprep.subr.bf16.mxu0 %v2247
    %2484 = vmatpush1.bf16.msra.mxu0 %v2246
    %2485 = vmatprep.subr.bf16.mxu0 %v2243
    %2486 = vmatpush1.bf16.msra.mxu0 %v2242
    %2487 = vmatprep.subr.bf16.mxu0 %v2239
    %2488 = vmatpush1.bf16.msra.mxu0 %v2238
    %2489 = vmatprep.subr.bf16.mxu0 %v2299
    %2490 = vmatpush2.bf16.msra.mxu0 %v2298
    %2491 = vmatprep.subr.bf16.mxu0 %v2295
    %2492 = vmatpush2.bf16.msra.mxu0 %v2294
    %2493 = vmatprep.subr.bf16.mxu0 %v2291
    %2494 = vmatpush2.bf16.msra.mxu0 %v2290
    %2495 = vmatprep.subr.bf16.mxu0 %v2287
    %2496 = vmatpush2.bf16.msra.mxu0 %v2286
    %2497 = vmatprep.subr.bf16.mxu0 %v2283
    %2498 = vmatpush2.bf16.msra.mxu0 %v2282
    %2499 = vmatprep.subr.bf16.mxu0 %v2279
    %2500 = vmatpush2.bf16.msra.mxu0 %v2278
    %2501 = vmatprep.subr.bf16.mxu0 %v2275
    %2502 = vmatpush2.bf16.msra.mxu0 %v2274
    %2503 = vmatprep.subr.bf16.mxu0 %v2271
    %2504 = vmatpush2.bf16.msra.mxu0 %v2270
    %2505 = vmatprep.mubr.bf16.mxu0 %v1639
    %2506 = vmatmul.mubr.bf16.gmra.mxu0 %v1638
    %v2507 = vpop.f32.mrf.mxu0
    %v2508 = vadd.f32 %v2465, %v2507
    %v2509 = vpop.f32.mrf.mxu0
    %v2510 = vadd.f32 %v2467, %v2509
    %v2511 = vpop.f32.mrf.mxu0
    %v2512 = vadd.f32 %v2469, %v2511
    %v2513 = vpop.f32.mrf.mxu0
    %v2514 = vadd.f32 %v2471, %v2513
    %2515 = vdwg.mxu0
    %2516 = vmatprep.subr.bf16.mxu0 %v2205
    %2517 = vmatpush1.bf16.msra.mxu0 %v2204
    %2518 = vmatprep.subr.bf16.mxu0 %v2201
    %2519 = vmatpush1.bf16.msra.mxu0 %v2200
    %2520 = vmatprep.subr.bf16.mxu0 %v2197
    %2521 = vmatpush1.bf16.msra.mxu0 %v2196
    %2522 = vmatprep.subr.bf16.mxu0 %v2193
    %2523 = vmatpush1.bf16.msra.mxu0 %v2192
    %2524 = vmatprep.subr.bf16.mxu0 %v2189
    %2525 = vmatpush1.bf16.msra.mxu0 %v2188
    %2526 = vmatprep.subr.bf16.mxu0 %v2185
    %2527 = vmatpush1.bf16.msra.mxu0 %v2184
    %2528 = vmatprep.subr.bf16.mxu0 %v2181
    %2529 = vmatpush1.bf16.msra.mxu0 %v2180
    %2530 = vmatprep.subr.bf16.mxu0 %v2177
    %2531 = vmatpush1.bf16.msra.mxu0 %v2176
    %2532 = vmatprep.subr.bf16.mxu0 %v2237
    %2533 = vmatpush2.bf16.msra.mxu0 %v2236
    %2534 = vmatprep.subr.bf16.mxu0 %v2233
    %2535 = vmatpush2.bf16.msra.mxu0 %v2232
    %2536 = vmatprep.subr.bf16.mxu0 %v2229
    %2537 = vmatpush2.bf16.msra.mxu0 %v2228
    %2538 = vmatprep.subr.bf16.mxu0 %v2225
    %2539 = vmatpush2.bf16.msra.mxu0 %v2224
    %2540 = vmatprep.subr.bf16.mxu0 %v2221
    %2541 = vmatpush2.bf16.msra.mxu0 %v2220
    %2542 = vmatprep.subr.bf16.mxu0 %v2217
    %2543 = vmatpush2.bf16.msra.mxu0 %v2216
    %2544 = vmatprep.subr.bf16.mxu0 %v2213
    %2545 = vmatpush2.bf16.msra.mxu0 %v2212
    %2546 = vmatprep.subr.bf16.mxu0 %v2209
    %2547 = vmatpush2.bf16.msra.mxu0 %v2208
    %2548 = vmatprep.mubr.bf16.mxu0 %v1637
    %2549 = vmatmul.mubr.bf16.gmra.mxu0 %v1636
    %v2550 = vpop.f32.mrf.mxu0
    %v2551 = vadd.f32 %v1781, %v2550
    %v2552 = vpop.f32.mrf.mxu0
    %v2553 = vadd.f32 %v1785, %v2552
    %v2554 = vpop.f32.mrf.mxu0
    %v2555 = vadd.f32 %v1781, %v2554
    %v2556 = vpop.f32.mrf.mxu0
    %v2557 = vadd.f32 %v1785, %v2556
    %2558 = vdwg.mxu0
    %2559 = vmatprep.subr.bf16.mxu0 %v2269
    %2560 = vmatpush1.bf16.msra.mxu0 %v2268
    %2561 = vmatprep.subr.bf16.mxu0 %v2265
    %2562 = vmatpush1.bf16.msra.mxu0 %v2264
    %2563 = vmatprep.subr.bf16.mxu0 %v2261
    %2564 = vmatpush1.bf16.msra.mxu0 %v2260
    %2565 = vmatprep.subr.bf16.mxu0 %v2257
    %2566 = vmatpush1.bf16.msra.mxu0 %v2256
    %2567 = vmatprep.subr.bf16.mxu0 %v2253
    %2568 = vmatpush1.bf16.msra.mxu0 %v2252
    %2569 = vmatprep.subr.bf16.mxu0 %v2249
    %2570 = vmatpush1.bf16.msra.mxu0 %v2248
    %2571 = vmatprep.subr.bf16.mxu0 %v2245
    %2572 = vmatpush1.bf16.msra.mxu0 %v2244
    %2573 = vmatprep.subr.bf16.mxu0 %v2241
    %2574 = vmatpush1.bf16.msra.mxu0 %v2240
    %2575 = vmatprep.subr.bf16.mxu0 %v2301
    %2576 = vmatpush2.bf16.msra.mxu0 %v2300
    %2577 = vmatprep.subr.bf16.mxu0 %v2297
    %2578 = vmatpush2.bf16.msra.mxu0 %v2296
    %2579 = vmatprep.subr.bf16.mxu0 %v2293
    %2580 = vmatpush2.bf16.msra.mxu0 %v2292
    %2581 = vmatprep.subr.bf16.mxu0 %v2289
    %2582 = vmatpush2.bf16.msra.mxu0 %v2288
    %2583 = vmatprep.subr.bf16.mxu0 %v2285
    %2584 = vmatpush2.bf16.msra.mxu0 %v2284
    %2585 = vmatprep.subr.bf16.mxu0 %v2281
    %2586 = vmatpush2.bf16.msra.mxu0 %v2280
    %2587 = vmatprep.subr.bf16.mxu0 %v2277
    %2588 = vmatpush2.bf16.msra.mxu0 %v2276
    %2589 = vmatprep.subr.bf16.mxu0 %v2273
    %2590 = vmatpush2.bf16.msra.mxu0 %v2272
    %2591 = vmatprep.mubr.bf16.mxu0 %v1639
    %2592 = vmatmul.mubr.bf16.gmra.mxu0 %v1638
    %v2593 = vpop.f32.mrf.mxu0
    %v2594 = vadd.f32 %v2551, %v2593
    %v2595 = vpop.f32.mrf.mxu0
    %v2596 = vadd.f32 %v2553, %v2595
    %v2597 = vpop.f32.mrf.mxu0
    %v2598 = vadd.f32 %v2555, %v2597
    %v2599 = vpop.f32.mrf.mxu0
    %v2600 = vadd.f32 %v2557, %v2599
    %2601 = vdwg.mxu0
    %v2602 = vpack.c.bf16 %v2512, %v2508
    %v2603 = vpack.c.bf16 %v2514, %v2510
    %v2604 = vpack.c.bf16 %v2598, %v2594
    %v2605 = vpack.c.bf16 %v2600, %v2596
    %v2610 = vunpack.c.l.b16 %v2602
    %v2611 = vunpack.c.l.b16 %v2603
    %v2612 = vunpack.c.l.b16 %v2604
    %v2613 = vunpack.c.l.b16 %v2605
    %v2614 = vunpack.c.h.b16 %v2602
    %v2615 = vunpack.c.h.b16 %v2603
    %v2616 = vunpack.c.h.b16 %v2604
    %v2617 = vunpack.c.h.b16 %v2605
    %v2618 = vpack.c.b16 %v2611, %v2610
    %v2619 = vpack.c.b16 %v2613, %v2612
    %v2620 = vpack.c.b16 %v2615, %v2614
    %v2621 = vpack.c.b16 %v2617, %v2616
    %2626 = vst [vmem:[#allocation14] sm:$0xff] %v2618
    %2627 = vst [vmem:[#allocation14 + $0x8] sm:$0xff] %v2619
    %2628 = vst [vmem:[#allocation14 + $0x10] sm:$0xff] %v2620
    %2629 = vst [vmem:[#allocation14 + $0x18] sm:$0xff] %v2621
    // Predicated region
    $region66: #{tpu_custom_call.1} parent=1 // pred_check
      _
    $region67: #{tpu_custom_call.1} parent=1 // pred_check_branch
      %2631 = sbr.rel (0) target = $region69
    $region68: #{tpu_custom_call.1} parent=1 // pred_region
      %s2633 = ssub.s32 512, 256
      %2634 = vsyncadd [#allocation4], %s2633
      %s2635 = sshll.u32 [#allocation14], 4
      %s2636 = int_to_ptr.vmem [resolvable:$true] %s2635
      %2641 = dma.vmem_to_hbm [thread:$0]  %s2636, 256, %s9, [#allocation4], 256, 256, 16
    $region69: #{tpu_custom_call.1} parent=1 // pred_fallthru
      _
    // Predicated region
    $region70: #{tpu_custom_call.1} parent=1 // pred_check
      _
    $region71: #{tpu_custom_call.1} parent=1 // pred_check_branch
      %2643 = sbr.rel (0) target = $region73
    $region72: #{tpu_custom_call.1} parent=1 // pred_region
      %2644 = dma.done [#allocation4], 512
    $region73: #{tpu_custom_call.1} parent=1 // pred_fallthru
      _
    %2645 = vsyncpa [#allocation3], 1
    %2646 = vsyncpa [#allocation6], 1
    %2647 = vsyncpa [#allocation9], 1
    %2648 = vsyncpa [#allocation12], 1
    %2649 = vsyncpa [#allocation4], 1

</llo_original>
